<compile_context>
chip_gen: v7x
topology: tpu7x:2x2x1
jax: 0.10.0
libtpu: 0.0.40
codegen_flags: <defaults>
</compile_context>

<pallas_src>
import functools
import math
from typing import NamedTuple

import numpy as np
import jax
import jax.numpy as jnp
from jax.experimental import pallas as pl
from jax.experimental.pallas import tpu as pltpu

SOFTPLUS_BETA = 100.0
SOFTPLUS_THRESHOLD = 20.0  # PyTorch nn.Softplus default threshold


def _softplus(y):
    # PyTorch Softplus(beta=100): y if beta*y > threshold else log1p(exp(beta*y))/beta
    z = y * SOFTPLUS_BETA
    sp = jnp.log1p(jnp.exp(jnp.minimum(z, SOFTPLUS_THRESHOLD))) / SOFTPLUS_BETA
    return jnp.where(z > SOFTPLUS_THRESHOLD, y, sp)


def _round_up(x, m):
    return ((x + m - 1) // m) * m


# ---------------------------------------------------------------------------
# Model configuration (static, hashable -> can be a jit static arg)
# ---------------------------------------------------------------------------
class NetConfig(NamedTuple):
    lat_dim_glob: int
    lat_dim_loc: int
    n_loc: int            # number of keypoints / local parts
    n_symm_pairs: int
    hidden_dim: int
    n_layers: int
    pos_mlp_dim: int
    out_dim: int = 1
    input_dim: int = 3

    @property
    def lat_dim(self):
        return self.lat_dim_glob + (self.n_loc + 1) * self.lat_dim_loc

    @property
    def ensemble_size(self):
        return self.n_loc + 1

    @property
    def lat_dim_part(self):
        return self.lat_dim_glob + self.lat_dim_loc

    @property
    def d_in(self):
        return self.input_dim + self.lat_dim_part

    @property
    def dims(self):
        return tuple([self.d_in] + [self.hidden_dim] * self.n_layers + [self.out_dim])

    @property
    def skip_in(self):
        return (self.n_layers // 2,)

    @property
    def num_layers(self):
        return len(self.dims)

    @property
    def kinds(self):
        # per linear layer: "first" (consumes split coords/cond),
        # "skip" (hidden + split coords/cond), "lin" (plain hidden)
        out = []
        for l in range(self.num_layers - 1):
            if l == 0:
                out.append("first")
            elif l in self.skip_in:
                out.append("skip")
            else:
                out.append("lin")
        return tuple(out)


# ---------------------------------------------------------------------------
# Fused Pallas kernel: whole EnsembledDeepSDF MLP for one (member, point tile)
# ---------------------------------------------------------------------------
def _fused_deepsdf_kernel(*refs, kinds):
    """refs = (coords_ref, cond_ref, *param_refs, out_ref)

    coords_ref : (1, 3, TN)            feature-major query coordinates
    cond_ref   : (1, lat_dim_part, TN) feature-major conditioning latent
    params     : per layer,
        "first" -> Wx (1,dout,3), Wc (1,dout,ldp), b (1,dout,1)
        "skip"  -> Wh (1,dout,dx), Wix (1,dout,3), Wic (1,dout,ldp), b (1,dout,1)
        "lin"   -> W  (1,dout,din), b (1,dout,1)
        (skip weights already carry the 1/sqrt(2) factor)
    out_ref    : (1, out_dim, TN)      lane-dense final SDF
    """
    coords_ref, cond_ref = refs[0], refs[1]
    out_ref = refs[-1]
    params = refs[2:-1]

    xyz = coords_ref[0]              # (3, TN), points on the lane axis
    cnd = cond_ref[0]                # (ldp, TN)

    x = None
    i = 0
    n_lin = len(kinds)
    for li, kind in enumerate(kinds):        # static, fully unrolled layer loop
        if kind == "first":
            wx, wc, b = params[i][0], params[i + 1][0], params[i + 2][0]
            i += 3
            y = (jnp.dot(wx, xyz, preferred_element_type=jnp.float32)
                 + jnp.dot(wc, cnd, preferred_element_type=jnp.float32)
                 + b)
        elif kind == "skip":
            # lin(concat([x, xyz, cnd], 0)/sqrt(2))
            #   == (Wh/√2)@x + (Wix/√2)@xyz + (Wic/√2)@cnd + b
            wh, wix, wic, b = (params[i][0], params[i + 1][0],
                               params[i + 2][0], params[i + 3][0])
            i += 4
            y = (jnp.dot(wh, x, preferred_element_type=jnp.float32)
                 + jnp.dot(wix, xyz, preferred_element_type=jnp.float32)
                 + jnp.dot(wic, cnd, preferred_element_type=jnp.float32)
                 + b)
        else:
            w, b = params[i][0], params[i + 1][0]
            i += 2
            y = jnp.dot(w, x, preferred_element_type=jnp.float32) + b
        if li < n_lin - 1:
            y = _softplus(y)
        x = y
    out_ref[0] = x.astype(out_ref.dtype)


def fused_ensembled_deepsdf(prepared, coords, cond, cfg: NetConfig):
    """coords: (E, B, nP, 3), cond: (E, B, nP, lat_dim_part) -> (E, B, nP, out_dim)."""
    E, Bsz, nP, _ = coords.shape
    n_tot = Bsz * nP

    # Feature-major: (E, C, n_tot) so points land on the lane axis.  No concat
    # of coords/cond is materialized — the kernel consumes them separately.
    coords_fm = jnp.transpose(
        coords.reshape(E, n_tot, cfg.input_dim).astype(jnp.float32), (0, 2, 1))
    cond_fm = jnp.transpose(
        cond.reshape(E, n_tot, cfg.lat_dim_part).astype(jnp.float32), (0, 2, 1))

    TN = min(1024, _round_up(n_tot, 128))        # point tile (lane) size
    n_pad = _round_up(n_tot, TN)
    if n_pad != n_tot:
        pad = n_pad - n_tot
        coords_fm = jnp.pad(coords_fm, ((0, 0), (0, 0), (0, pad)))
        cond_fm = jnp.pad(cond_fm, ((0, 0), (0, 0), (0, pad)))

    flat_params = []
    in_specs = [
        pl.BlockSpec((1, cfg.input_dim, TN), lambda e, n: (e, 0, n)),
        pl.BlockSpec((1, cfg.lat_dim_part, TN), lambda e, n: (e, 0, n)),
    ]
    for layer_tensors in prepared:
        for t in layer_tensors:
            flat_params.append(t)
            # Weights/biases: full per-member block; index map independent of the
            # point-tile (inner) axis -> kept resident across inner grid steps.
            in_specs.append(
                pl.BlockSpec((1, t.shape[1], t.shape[2]), lambda e, n: (e, 0, 0)))

    kernel = functools.partial(_fused_deepsdf_kernel, kinds=cfg.kinds)
    out = pl.pallas_call(
        kernel,
        out_shape=jax.ShapeDtypeStruct((E, cfg.out_dim, n_pad), jnp.float32),
        grid=(E, n_pad // TN),
        in_specs=in_specs,
        out_specs=pl.BlockSpec((1, cfg.out_dim, TN), lambda e, n: (e, 0, n)),
        compiler_params=pltpu.CompilerParams(
            dimension_semantics=("parallel", "parallel"),
            vmem_limit_bytes=32 * 1024 * 1024),
    )(coords_fm, cond_fm, *flat_params)

    out = out[:, :, :n_tot]                                   # (E, out_dim, n_tot)
    return jnp.transpose(out, (0, 2, 1)).reshape(E, Bsz, nP, cfg.out_dim)


# ---------------------------------------------------------------------------
# Parameters (deterministic init mirroring the PyTorch module) + one-time prep
# ---------------------------------------------------------------------------
def init_params(key, cfg: NetConfig):
    dims = cfg.dims
    n_store = cfg.ensemble_size - cfg.n_symm_pairs
    sdf_raw = []
    for layer in range(cfg.num_layers - 1):
        o_dim = dims[layer + 1] - cfg.d_in if (layer + 1) in cfg.skip_in else dims[layer + 1]
        i_dim = dims[layer]
        key, kw, kb = jax.random.split(key, 3)
        bound = 1.0 / math.sqrt(i_dim)   # kaiming_uniform(a=sqrt(5)) == U(-1/sqrt(fan_in), .)
        w = jax.random.uniform(kw, (n_store, o_dim, i_dim), jnp.float32, -bound, bound)
        b = jax.random.uniform(kb, (n_store, o_dim), jnp.float32, -bound, bound)
        sdf_raw.append((w, b))

    mlp_pos = []
    sizes = [(cfg.lat_dim_glob, cfg.pos_mlp_dim),
             (cfg.pos_mlp_dim, cfg.pos_mlp_dim),
             (cfg.pos_mlp_dim, cfg.n_loc * 3)]
    for fi, fo in sizes:
        key, kw, kb = jax.random.split(key, 3)
        bound = 1.0 / math.sqrt(fi)
        W = jax.random.uniform(kw, (fo, fi), jnp.float32, -bound, bound)
        b = jax.random.uniform(kb, (fo,), jnp.float32, -bound, bound)
        mlp_pos.append((W, b))

    key, ka = jax.random.split(key)
    anchors = jax.random.normal(ka, (1, cfg.n_loc, 3), jnp.float32) * 0.2
    return {"sdf_raw": sdf_raw, "mlp_pos": mlp_pos, "anchors": anchors}


def _expand_symm(w, b, n_symm):
    # weight sharing between symmetric ensemble members (repeat_interleave(2) + cat)
    W = jnp.concatenate([jnp.repeat(w[:n_symm], 2, axis=0), w[n_symm:]], axis=0)
    B = jnp.concatenate([jnp.repeat(b[:n_symm], 2, axis=0), b[n_symm:]], axis=0)
    return W, B


def prepare_sdf_params(sdf_raw, cfg: NetConfig):
    """One-time prep (hoisted out of the forward): expand symmetric weight sharing,
    reshape biases for lane broadcast, fold 1/sqrt(2) into the skip-layer weights,
    split the coords/cond-consuming weights so no concatenated input is needed."""
    assert cfg.n_layers >= 2, "skip layer must not coincide with the first layer"
    prepared = []
    for layer, (w, b) in enumerate(sdf_raw):
        W, Bv = _expand_symm(w, b, cfg.n_symm_pairs)    # (E, dout, din), (E, dout)
        Bv = Bv[:, :, None]                             # (E, dout, 1)
        if layer == 0:
            prepared.append((W[:, :, :cfg.input_dim],       # acts on coords
                             W[:, :, cfg.input_dim:],       # acts on cond
                             Bv))
        elif layer in cfg.skip_in:
            dx = cfg.dims[layer] - cfg.d_in             # width of the running activation
            s = np.float32(1.0 / math.sqrt(2.0))
            Wh = W[:, :, :dx] * s
            Winp = W[:, :, dx:] * s
            prepared.append((Wh,
                             Winp[:, :, :cfg.input_dim],
                             Winp[:, :, cfg.input_dim:],
                             Bv))
        else:
            prepared.append((W, Bv))
    return tuple(prepared)


# ---------------------------------------------------------------------------
# Pure-JAX reference of the EnsembledDeepSDF MLP
# ---------------------------------------------------------------------------
def reference_ensembled_deepsdf(sdf_raw, coords, cond, cfg: NetConfig):
    E, Bsz, nP, _ = coords.shape
    inp = jnp.concatenate([coords, cond], axis=-1).reshape(E, Bsz * nP, cfg.d_in)
    x = inp
    for layer in range(cfg.num_layers - 1):
        w, b = sdf_raw[layer]
        W, Bv = _expand_symm(w, b, cfg.n_symm_pairs)
        if layer in cfg.skip_in:
            x = jnp.concatenate([x, inp], axis=-1) / np.sqrt(2)
        x = jnp.einsum('eoi,eni->eno', W, x) + Bv[:, None, :]
        if layer < cfg.num_layers - 2:
            x = _softplus(x)
    return x.reshape(E, Bsz, nP, -1)


# ---------------------------------------------------------------------------
# Full FastEnsembleDeepSDFMirrored forward (glue in plain JAX)
# ---------------------------------------------------------------------------
def mlp_pos_forward(mlp_params, z):
    h = z
    for i, (W, b) in enumerate(mlp_params):
        h = h @ W.T + b
        if i < len(mlp_params) - 1:
            h = jax.nn.relu(h)
    return h


def sample_point_feature(q, p, fea, var=0.1 ** 2, background=False):
    # q: (B, Nq, 3), p: (B, K, 3), fea: (B, Nq, K(+1), C)
    dist = -(jnp.linalg.norm(p[:, None, :, :] - q[:, :, None, :], axis=3) + 1e-05) ** 2
    if background:
        dist_const = jnp.ones_like(dist[:, :, :1]) * (-0.2)
        dist = jnp.concatenate([dist, dist_const], axis=-1)
    weight = jnp.exp(dist / var)
    weight = weight / (weight.sum(axis=2, keepdims=True) + 1e-06)
    return (weight[..., None] * fea).sum(axis=2)


def fast_ensemble_forward(params, xyz, lat_rep, cfg: NetConfig,
                          use_pallas=True, training=False):
    """JAX port of FastEnsembleDeepSDFMirrored.forward (anchors_gt is unused)."""
    if xyz.ndim < 3:
        xyz = xyz[None]
    B, N, _ = xyz.shape
    if lat_rep.shape[1] == 1:
        lat_rep = jnp.repeat(lat_rep, N, axis=1)
    assert cfg.lat_dim == lat_rep.shape[-1]

    # predicted facial anchors
    anchors = mlp_pos_forward(params["mlp_pos"],
                              lat_rep[:, 0, :cfg.lat_dim_glob]).reshape(B, cfg.n_loc, 3)
    anchors = anchors + jnp.squeeze(params["anchors"], axis=0)
    anchors_rep = jnp.broadcast_to(anchors[:, None], (B, N, cfg.n_loc, 3))

    # per-member local coordinates (last member has no anchor)
    coords = xyz[:, :, None, :] - jnp.concatenate(
        [anchors_rep, jnp.zeros_like(anchors_rep[:, :, :1, :])], axis=2)
    sign = np.ones((cfg.n_loc + 1, 3), np.float32)
    sign[1:2 * cfg.n_symm_pairs:2, 0] = -1.0        # mirror x of symmetric partners
    coords = coords * jnp.asarray(sign)[None, None]

    # per-member conditioning: [global latent, member-local latent]
    t1 = jnp.broadcast_to(lat_rep[:, :, None, :cfg.lat_dim_glob],
                          (B, N, cfg.n_loc + 1, cfg.lat_dim_glob))
    t2 = lat_rep[:, :, cfg.lat_dim_glob:].reshape(B, N, cfg.n_loc + 1, cfg.lat_dim_loc)
    cond = jnp.concatenate([t1, t2], axis=-1)

    coords_e = jnp.transpose(coords, (2, 0, 1, 3))   # (E, B, N, 3)
    cond_e = jnp.transpose(cond, (2, 0, 1, 3))       # (E, B, N, lat_dim_part)

    if use_pallas:
        sdf_pred = fused_ensembled_deepsdf(params["sdf_prepared"], coords_e, cond_e, cfg)
    else:
        sdf_pred = reference_ensembled_deepsdf(params["sdf_raw"], coords_e, cond_e, cfg)

    if not training:                                 # eval-mode override (as in PyTorch)
        sdf_pred = sdf_pred.at[:, :, -1, 0].set(1.0)
    sdf_pred = jnp.transpose(sdf_pred, (1, 2, 0, 3))  # (B, N, E, out_dim)

    pred = sample_point_feature(xyz[..., :3], anchors[:, :, :3], sdf_pred,
                                var=0.1 ** 2, background=True)
    return pred, anchors


# ---------------------------------------------------------------------------
if __name__ == "__main__":
    cfg = NetConfig(lat_dim_glob=8, lat_dim_loc=4, n_loc=5, n_symm_pairs=2,
                    hidden_dim=32, n_layers=4, pos_mlp_dim=16, out_dim=1, input_dim=3)
    B, N = 2, 16

    key = jax.random.PRNGKey(0)
    key, kp, kx, kl = jax.random.split(key, 4)
    params = init_params(kp, cfg)
    params["sdf_prepared"] = prepare_sdf_params(params["sdf_raw"], cfg)

    xyz = jax.random.normal(kx, (B, N, 3), jnp.float32) * 0.3
    lat_rep = jax.random.normal(kl, (B, 1, cfg.lat_dim), jnp.float32) * 0.3

    fwd = jax.jit(fast_ensemble_forward,
                  static_argnames=("cfg", "use_pallas", "training"))

    pred, anchors_out = fwd(params, xyz, lat_rep, cfg=cfg, use_pallas=True, training=False)
    pred = jax.block_until_ready(pred)
    pred_ref, anchors_ref = fwd(params, xyz, lat_rep, cfg=cfg, use_pallas=False, training=False)
    pred_ref = jax.block_until_ready(pred_ref)

    assert pred.shape == (B, N, cfg.out_dim), pred.shape
    assert anchors_out.shape == (B, cfg.n_loc, 3), anchors_out.shape
    np.testing.assert_allclose(np.asarray(anchors_out), np.asarray(anchors_ref),
                               rtol=1e-5, atol=1e-5)
    np.testing.assert_allclose(np.asarray(pred), np.asarray(pred_ref),
                               rtol=1e-3, atol=1e-3)

    # Direct check of the fused MLP kernel against the pure-JAX reference.
    kc, kd = jax.random.split(key)
    coords_t = jax.random.normal(kc, (cfg.ensemble_size, B, N, cfg.input_dim), jnp.float32)
    cond_t = jax.random.normal(kd, (cfg.ensemble_size, B, N, cfg.lat_dim_part), jnp.float32)
    sdf_k = jax.block_until_ready(
        fused_ensembled_deepsdf(params["sdf_prepared"], coords_t, cond_t, cfg))
    sdf_r = reference_ensembled_deepsdf(params["sdf_raw"], coords_t, cond_t, cfg)
    np.testing.assert_allclose(np.asarray(sdf_k), np.asarray(sdf_r), rtol=5e-4, atol=5e-4)

    print("KERNEL_OK")
</pallas_src>

<mosaic_0001>
module attributes {stable_mosaic.version = 11 : i64} {
  func.func @_fused_deepsdf_kernel(%arg0: i32, %arg1: i32, %arg2: memref<1x3x128xf32, #tpu.memory_space<vmem>>, %arg3: memref<1x12x128xf32, #tpu.memory_space<vmem>>, %arg4: memref<1x32x3xf32, #tpu.memory_space<vmem>>, %arg5: memref<1x32x12xf32, #tpu.memory_space<vmem>>, %arg6: memref<1x32x1xf32, #tpu.memory_space<vmem>>, %arg7: memref<1x17x32xf32, #tpu.memory_space<vmem>>, %arg8: memref<1x17x1xf32, #tpu.memory_space<vmem>>, %arg9: memref<1x32x17xf32, #tpu.memory_space<vmem>>, %arg10: memref<1x32x3xf32, #tpu.memory_space<vmem>>, %arg11: memref<1x32x12xf32, #tpu.memory_space<vmem>>, %arg12: memref<1x32x1xf32, #tpu.memory_space<vmem>>, %arg13: memref<1x32x32xf32, #tpu.memory_space<vmem>>, %arg14: memref<1x32x1xf32, #tpu.memory_space<vmem>>, %arg15: memref<1x1x32xf32, #tpu.memory_space<vmem>>, %arg16: memref<1x1x1xf32, #tpu.memory_space<vmem>>, %arg17: memref<1x1x128xf32, #tpu.memory_space<vmem>>) attributes {dimension_semantics = [#tpu.dimension_semantics<parallel>, #tpu.dimension_semantics<parallel>], iteration_bounds = array<i64: 6, 1>, scalar_prefetch = 0 : i64, scratch_operands = 0 : i64, tpu.core_type = #tpu.core_type<tc>, window_params = [{transform_indices = @transform_0, window_bounds = array<i64: 1, 3, 128>}, {transform_indices = @transform_1, window_bounds = array<i64: 1, 12, 128>}, {transform_indices = @transform_2, window_bounds = array<i64: 1, 32, 3>}, {transform_indices = @transform_3, window_bounds = array<i64: 1, 32, 12>}, {transform_indices = @transform_4, window_bounds = array<i64: 1, 32, 1>}, {transform_indices = @transform_5, window_bounds = array<i64: 1, 17, 32>}, {transform_indices = @transform_6, window_bounds = array<i64: 1, 17, 1>}, {transform_indices = @transform_7, window_bounds = array<i64: 1, 32, 17>}, {transform_indices = @transform_8, window_bounds = array<i64: 1, 32, 3>}, {transform_indices = @transform_9, window_bounds = array<i64: 1, 32, 12>}, {transform_indices = @transform_10, window_bounds = array<i64: 1, 32, 1>}, {transform_indices = @transform_11, window_bounds = array<i64: 1, 32, 32>}, {transform_indices = @transform_12, window_bounds = array<i64: 1, 32, 1>}, {transform_indices = @transform_13, window_bounds = array<i64: 1, 1, 32>}, {transform_indices = @transform_14, window_bounds = array<i64: 1, 1, 1>}, {transform_indices = @transform_15, window_bounds = array<i64: 1, 1, 128>}]} {
    %c0 = arith.constant 0 : index
    %c0_0 = arith.constant 0 : index
    %c0_1 = arith.constant 0 : index
    %0 = vector.load %arg2[%c0, %c0_0, %c0_1] : memref<1x3x128xf32, #tpu.memory_space<vmem>>, vector<1x3x128xf32>
    %1 = vector.shape_cast %0 : vector<1x3x128xf32> to vector<3x128xf32>
    %c0_2 = arith.constant 0 : index
    %c0_3 = arith.constant 0 : index
    %c0_4 = arith.constant 0 : index
    %2 = vector.load %arg3[%c0_2, %c0_3, %c0_4] : memref<1x12x128xf32, #tpu.memory_space<vmem>>, vector<1x12x128xf32>
    %3 = vector.shape_cast %2 : vector<1x12x128xf32> to vector<12x128xf32>
    %c0_5 = arith.constant 0 : index
    %c0_6 = arith.constant 0 : index
    %c0_7 = arith.constant 0 : index
    %4 = vector.load %arg4[%c0_5, %c0_6, %c0_7] : memref<1x32x3xf32, #tpu.memory_space<vmem>>, vector<1x32x3xf32>
    %5 = vector.shape_cast %4 : vector<1x32x3xf32> to vector<32x3xf32>
    %c0_8 = arith.constant 0 : index
    %c0_9 = arith.constant 0 : index
    %c0_10 = arith.constant 0 : index
    %6 = vector.load %arg5[%c0_8, %c0_9, %c0_10] : memref<1x32x12xf32, #tpu.memory_space<vmem>>, vector<1x32x12xf32>
    %7 = vector.shape_cast %6 : vector<1x32x12xf32> to vector<32x12xf32>
    %c0_11 = arith.constant 0 : index
    %c0_12 = arith.constant 0 : index
    %c0_13 = arith.constant 0 : index
    %8 = vector.load %arg6[%c0_11, %c0_12, %c0_13] : memref<1x32x1xf32, #tpu.memory_space<vmem>>, vector<1x32x1xf32>
    %9 = vector.shape_cast %8 : vector<1x32x1xf32> to vector<32x1xf32>
    %cst = arith.constant dense<0.000000e+00> : vector<32x128xf32>
    %10 = tpu.matmul %5, %1, %cst {dimension_numbers = #tpu.dot_dimension_numbers<[1], [0], [0], [1], [0, 0, 1, 1], [], []>} : vector<32x3xf32>, vector<3x128xf32>, vector<32x128xf32> -> vector<32x128xf32>
    %cst_14 = arith.constant dense<0.000000e+00> : vector<32x128xf32>
    %11 = tpu.matmul %7, %3, %cst_14 {dimension_numbers = #tpu.dot_dimension_numbers<[1], [0], [0], [1], [0, 0, 1, 1], [], []>} : vector<32x12xf32>, vector<12x128xf32>, vector<32x128xf32> -> vector<32x128xf32>
    %12 = arith.addf %10, %11 : vector<32x128xf32>
    %13 = vector.broadcast %9 : vector<32x1xf32> to vector<32x128xf32>
    %14 = arith.addf %12, %13 : vector<32x128xf32>
    %cst_15 = arith.constant 1.000000e+02 : f32
    %15 = vector.broadcast %cst_15 : f32 to vector<32x128xf32>
    %16 = arith.mulf %14, %15 : vector<32x128xf32>
    %cst_16 = arith.constant 2.000000e+01 : f32
    %17 = vector.broadcast %cst_16 : f32 to vector<32x128xf32>
    %18 = arith.minimumf %16, %17 : vector<32x128xf32>
    %19 = math.exp %18 : vector<32x128xf32>
    %20 = math.log1p %19 : vector<32x128xf32>
    %cst_17 = arith.constant 1.000000e+02 : f32
    %21 = vector.broadcast %cst_17 : f32 to vector<32x128xf32>
    %22 = arith.divf %20, %21 : vector<32x128xf32>
    %cst_18 = arith.constant 2.000000e+01 : f32
    %23 = vector.broadcast %cst_18 : f32 to vector<32x128xf32>
    %24 = arith.cmpf ogt, %16, %23 : vector<32x128xf32>
    %25 = arith.select %24, %14, %22 : vector<32x128xi1>, vector<32x128xf32>
    %c0_19 = arith.constant 0 : index
    %c0_20 = arith.constant 0 : index
    %c0_21 = arith.constant 0 : index
    %26 = vector.load %arg7[%c0_19, %c0_20, %c0_21] : memref<1x17x32xf32, #tpu.memory_space<vmem>>, vector<1x17x32xf32>
    %27 = vector.shape_cast %26 : vector<1x17x32xf32> to vector<17x32xf32>
    %c0_22 = arith.constant 0 : index
    %c0_23 = arith.constant 0 : index
    %c0_24 = arith.constant 0 : index
    %28 = vector.load %arg8[%c0_22, %c0_23, %c0_24] : memref<1x17x1xf32, #tpu.memory_space<vmem>>, vector<1x17x1xf32>
    %29 = vector.shape_cast %28 : vector<1x17x1xf32> to vector<17x1xf32>
    %cst_25 = arith.constant dense<0.000000e+00> : vector<17x128xf32>
    %30 = tpu.matmul %27, %25, %cst_25 {dimension_numbers = #tpu.dot_dimension_numbers<[1], [0], [0], [1], [0, 0, 1, 1], [], []>} : vector<17x32xf32>, vector<32x128xf32>, vector<17x128xf32> -> vector<17x128xf32>
    %31 = vector.broadcast %29 : vector<17x1xf32> to vector<17x128xf32>
    %32 = arith.addf %30, %31 : vector<17x128xf32>
    %cst_26 = arith.constant 1.000000e+02 : f32
    %33 = vector.broadcast %cst_26 : f32 to vector<17x128xf32>
    %34 = arith.mulf %32, %33 : vector<17x128xf32>
    %cst_27 = arith.constant 2.000000e+01 : f32
    %35 = vector.broadcast %cst_27 : f32 to vector<17x128xf32>
    %36 = arith.minimumf %34, %35 : vector<17x128xf32>
    %37 = math.exp %36 : vector<17x128xf32>
    %38 = math.log1p %37 : vector<17x128xf32>
    %cst_28 = arith.constant 1.000000e+02 : f32
    %39 = vector.broadcast %cst_28 : f32 to vector<17x128xf32>
    %40 = arith.divf %38, %39 : vector<17x128xf32>
    %cst_29 = arith.constant 2.000000e+01 : f32
    %41 = vector.broadcast %cst_29 : f32 to vector<17x128xf32>
    %42 = arith.cmpf ogt, %34, %41 : vector<17x128xf32>
    %43 = arith.select %42, %32, %40 : vector<17x128xi1>, vector<17x128xf32>
    %c0_30 = arith.constant 0 : index
    %c0_31 = arith.constant 0 : index
    %c0_32 = arith.constant 0 : index
    %44 = vector.load %arg9[%c0_30, %c0_31, %c0_32] : memref<1x32x17xf32, #tpu.memory_space<vmem>>, vector<1x32x17xf32>
    %45 = vector.shape_cast %44 : vector<1x32x17xf32> to vector<32x17xf32>
    %c0_33 = arith.constant 0 : index
    %c0_34 = arith.constant 0 : index
    %c0_35 = arith.constant 0 : index
    %46 = vector.load %arg10[%c0_33, %c0_34, %c0_35] : memref<1x32x3xf32, #tpu.memory_space<vmem>>, vector<1x32x3xf32>
    %47 = vector.shape_cast %46 : vector<1x32x3xf32> to vector<32x3xf32>
    %c0_36 = arith.constant 0 : index
    %c0_37 = arith.constant 0 : index
    %c0_38 = arith.constant 0 : index
    %48 = vector.load %arg11[%c0_36, %c0_37, %c0_38] : memref<1x32x12xf32, #tpu.memory_space<vmem>>, vector<1x32x12xf32>
    %49 = vector.shape_cast %48 : vector<1x32x12xf32> to vector<32x12xf32>
    %c0_39 = arith.constant 0 : index
    %c0_40 = arith.constant 0 : index
    %c0_41 = arith.constant 0 : index
    %50 = vector.load %arg12[%c0_39, %c0_40, %c0_41] : memref<1x32x1xf32, #tpu.memory_space<vmem>>, vector<1x32x1xf32>
    %51 = vector.shape_cast %50 : vector<1x32x1xf32> to vector<32x1xf32>
    %cst_42 = arith.constant dense<0.000000e+00> : vector<32x128xf32>
    %52 = tpu.matmul %45, %43, %cst_42 {dimension_numbers = #tpu.dot_dimension_numbers<[1], [0], [0], [1], [0, 0, 1, 1], [], []>} : vector<32x17xf32>, vector<17x128xf32>, vector<32x128xf32> -> vector<32x128xf32>
    %cst_43 = arith.constant dense<0.000000e+00> : vector<32x128xf32>
    %53 = tpu.matmul %47, %1, %cst_43 {dimension_numbers = #tpu.dot_dimension_numbers<[1], [0], [0], [1], [0, 0, 1, 1], [], []>} : vector<32x3xf32>, vector<3x128xf32>, vector<32x128xf32> -> vector<32x128xf32>
    %54 = arith.addf %52, %53 : vector<32x128xf32>
    %cst_44 = arith.constant dense<0.000000e+00> : vector<32x128xf32>
    %55 = tpu.matmul %49, %3, %cst_44 {dimension_numbers = #tpu.dot_dimension_numbers<[1], [0], [0], [1], [0, 0, 1, 1], [], []>} : vector<32x12xf32>, vector<12x128xf32>, vector<32x128xf32> -> vector<32x128xf32>
    %56 = arith.addf %54, %55 : vector<32x128xf32>
    %57 = vector.broadcast %51 : vector<32x1xf32> to vector<32x128xf32>
    %58 = arith.addf %56, %57 : vector<32x128xf32>
    %cst_45 = arith.constant 1.000000e+02 : f32
    %59 = vector.broadcast %cst_45 : f32 to vector<32x128xf32>
    %60 = arith.mulf %58, %59 : vector<32x128xf32>
    %cst_46 = arith.constant 2.000000e+01 : f32
    %61 = vector.broadcast %cst_46 : f32 to vector<32x128xf32>
    %62 = arith.minimumf %60, %61 : vector<32x128xf32>
    %63 = math.exp %62 : vector<32x128xf32>
    %64 = math.log1p %63 : vector<32x128xf32>
    %cst_47 = arith.constant 1.000000e+02 : f32
    %65 = vector.broadcast %cst_47 : f32 to vector<32x128xf32>
    %66 = arith.divf %64, %65 : vector<32x128xf32>
    %cst_48 = arith.constant 2.000000e+01 : f32
    %67 = vector.broadcast %cst_48 : f32 to vector<32x128xf32>
    %68 = arith.cmpf ogt, %60, %67 : vector<32x128xf32>
    %69 = arith.select %68, %58, %66 : vector<32x128xi1>, vector<32x128xf32>
    %c0_49 = arith.constant 0 : index
    %c0_50 = arith.constant 0 : index
    %c0_51 = arith.constant 0 : index
    %70 = vector.load %arg13[%c0_49, %c0_50, %c0_51] : memref<1x32x32xf32, #tpu.memory_space<vmem>>, vector<1x32x32xf32>
    %71 = vector.shape_cast %70 : vector<1x32x32xf32> to vector<32x32xf32>
    %c0_52 = arith.constant 0 : index
    %c0_53 = arith.constant 0 : index
    %c0_54 = arith.constant 0 : index
    %72 = vector.load %arg14[%c0_52, %c0_53, %c0_54] : memref<1x32x1xf32, #tpu.memory_space<vmem>>, vector<1x32x1xf32>
    %73 = vector.shape_cast %72 : vector<1x32x1xf32> to vector<32x1xf32>
    %cst_55 = arith.constant dense<0.000000e+00> : vector<32x128xf32>
    %74 = tpu.matmul %71, %69, %cst_55 {dimension_numbers = #tpu.dot_dimension_numbers<[1], [0], [0], [1], [0, 0, 1, 1], [], []>} : vector<32x32xf32>, vector<32x128xf32>, vector<32x128xf32> -> vector<32x128xf32>
    %75 = vector.broadcast %73 : vector<32x1xf32> to vector<32x128xf32>
    %76 = arith.addf %74, %75 : vector<32x128xf32>
    %cst_56 = arith.constant 1.000000e+02 : f32
    %77 = vector.broadcast %cst_56 : f32 to vector<32x128xf32>
    %78 = arith.mulf %76, %77 : vector<32x128xf32>
    %cst_57 = arith.constant 2.000000e+01 : f32
    %79 = vector.broadcast %cst_57 : f32 to vector<32x128xf32>
    %80 = arith.minimumf %78, %79 : vector<32x128xf32>
    %81 = math.exp %80 : vector<32x128xf32>
    %82 = math.log1p %81 : vector<32x128xf32>
    %cst_58 = arith.constant 1.000000e+02 : f32
    %83 = vector.broadcast %cst_58 : f32 to vector<32x128xf32>
    %84 = arith.divf %82, %83 : vector<32x128xf32>
    %cst_59 = arith.constant 2.000000e+01 : f32
    %85 = vector.broadcast %cst_59 : f32 to vector<32x128xf32>
    %86 = arith.cmpf ogt, %78, %85 : vector<32x128xf32>
    %87 = arith.select %86, %76, %84 : vector<32x128xi1>, vector<32x128xf32>
    %c0_60 = arith.constant 0 : index
    %c0_61 = arith.constant 0 : index
    %c0_62 = arith.constant 0 : index
    %88 = vector.load %arg15[%c0_60, %c0_61, %c0_62] : memref<1x1x32xf32, #tpu.memory_space<vmem>>, vector<1x1x32xf32>
    %89 = vector.shape_cast %88 : vector<1x1x32xf32> to vector<1x32xf32>
    %c0_63 = arith.constant 0 : index
    %c0_64 = arith.constant 0 : index
    %c0_65 = arith.constant 0 : index
    %90 = vector.load %arg16[%c0_63, %c0_64, %c0_65] : memref<1x1x1xf32, #tpu.memory_space<vmem>>, vector<1x1x1xf32>
    %91 = vector.shape_cast %90 : vector<1x1x1xf32> to vector<1x1xf32>
    %cst_66 = arith.constant dense<0.000000e+00> : vector<1x128xf32>
    %92 = tpu.matmul %89, %87, %cst_66 {dimension_numbers = #tpu.dot_dimension_numbers<[1], [0], [0], [1], [0, 0, 1, 1], [], []>} : vector<1x32xf32>, vector<32x128xf32>, vector<1x128xf32> -> vector<1x128xf32>
    %93 = vector.broadcast %91 : vector<1x1xf32> to vector<1x128xf32>
    %94 = arith.addf %92, %93 : vector<1x128xf32>
    %c0_67 = arith.constant 0 : index
    %c0_68 = arith.constant 0 : index
    %c0_69 = arith.constant 0 : index
    %95 = vector.load %arg17[%c0_67, %c0_68, %c0_69] : memref<1x1x128xf32, #tpu.memory_space<vmem>>, vector<1x1x128xf32>
    %96 = vector.shape_cast %95 : vector<1x1x128xf32> to vector<1x128xf32>
    %97 = vector.shape_cast %94 : vector<1x128xf32> to vector<1x1x128xf32>
    tpu.vector_store %arg17[%c0_67, %c0_68, %c0_69], %97 {strides = array<i32>} : memref<1x1x128xf32, #tpu.memory_space<vmem>>, vector<1x1x128xf32>,
    return
  }
  func.func @transform_0(%arg0: i32, %arg1: i32) -> (i32, i32, i32) {
    %c0_i32 = arith.constant 0 : i32
    %c0_i32_0 = arith.constant 0 : i32
    return %arg0, %c0_i32, %arg1 : i32, i32, i32
  }
  func.func @transform_1(%arg0: i32, %arg1: i32) -> (i32, i32, i32) {
    %c0_i32 = arith.constant 0 : i32
    %c0_i32_0 = arith.constant 0 : i32
    return %arg0, %c0_i32, %arg1 : i32, i32, i32
  }
  func.func @transform_2(%arg0: i32, %arg1: i32) -> (i32, i32, i32) {
    %c0_i32 = arith.constant 0 : i32
    %c0_i32_0 = arith.constant 0 : i32
    %c0_i32_1 = arith.constant 0 : i32
    return %arg0, %c0_i32, %c0_i32_0 : i32, i32, i32
  }
  func.func @transform_3(%arg0: i32, %arg1: i32) -> (i32, i32, i32) {
    %c0_i32 = arith.constant 0 : i32
    %c0_i32_0 = arith.constant 0 : i32
    %c0_i32_1 = arith.constant 0 : i32
    return %arg0, %c0_i32, %c0_i32_0 : i32, i32, i32
  }
  func.func @transform_4(%arg0: i32, %arg1: i32) -> (i32, i32, i32) {
    %c0_i32 = arith.constant 0 : i32
    %c0_i32_0 = arith.constant 0 : i32
    %c0_i32_1 = arith.constant 0 : i32
    return %arg0, %c0_i32, %c0_i32_0 : i32, i32, i32
  }
  func.func @transform_5(%arg0: i32, %arg1: i32) -> (i32, i32, i32) {
    %c0_i32 = arith.constant 0 : i32
    %c0_i32_0 = arith.constant 0 : i32
    %c0_i32_1 = arith.constant 0 : i32
    return %arg0, %c0_i32, %c0_i32_0 : i32, i32, i32
  }
  func.func @transform_6(%arg0: i32, %arg1: i32) -> (i32, i32, i32) {
    %c0_i32 = arith.constant 0 : i32
    %c0_i32_0 = arith.constant 0 : i32
    %c0_i32_1 = arith.constant 0 : i32
    return %arg0, %c0_i32, %c0_i32_0 : i32, i32, i32
  }
  func.func @transform_7(%arg0: i32, %arg1: i32) -> (i32, i32, i32) {
    %c0_i32 = arith.constant 0 : i32
    %c0_i32_0 = arith.constant 0 : i32
    %c0_i32_1 = arith.constant 0 : i32
    return %arg0, %c0_i32, %c0_i32_0 : i32, i32, i32
  }
  func.func @transform_8(%arg0: i32, %arg1: i32) -> (i32, i32, i32) {
    %c0_i32 = arith.constant 0 : i32
    %c0_i32_0 = arith.constant 0 : i32
    %c0_i32_1 = arith.constant 0 : i32
    return %arg0, %c0_i32, %c0_i32_0 : i32, i32, i32
  }
  func.func @transform_9(%arg0: i32, %arg1: i32) -> (i32, i32, i32) {
    %c0_i32 = arith.constant 0 : i32
    %c0_i32_0 = arith.constant 0 : i32
    %c0_i32_1 = arith.constant 0 : i32
    return %arg0, %c0_i32, %c0_i32_0 : i32, i32, i32
  }
  func.func @transform_10(%arg0: i32, %arg1: i32) -> (i32, i32, i32) {
    %c0_i32 = arith.constant 0 : i32
    %c0_i32_0 = arith.constant 0 : i32
    %c0_i32_1 = arith.constant 0 : i32
    return %arg0, %c0_i32, %c0_i32_0 : i32, i32, i32
  }
  func.func @transform_11(%arg0: i32, %arg1: i32) -> (i32, i32, i32) {
    %c0_i32 = arith.constant 0 : i32
    %c0_i32_0 = arith.constant 0 : i32
    %c0_i32_1 = arith.constant 0 : i32
    return %arg0, %c0_i32, %c0_i32_0 : i32, i32, i32
  }
  func.func @transform_12(%arg0: i32, %arg1: i32) -> (i32, i32, i32) {
    %c0_i32 = arith.constant 0 : i32
    %c0_i32_0 = arith.constant 0 : i32
    %c0_i32_1 = arith.constant 0 : i32
    return %arg0, %c0_i32, %c0_i32_0 : i32, i32, i32
  }
  func.func @transform_13(%arg0: i32, %arg1: i32) -> (i32, i32, i32) {
    %c0_i32 = arith.constant 0 : i32
    %c0_i32_0 = arith.constant 0 : i32
    %c0_i32_1 = arith.constant 0 : i32
    return %arg0, %c0_i32, %c0_i32_0 : i32, i32, i32
  }
  func.func @transform_14(%arg0: i32, %arg1: i32) -> (i32, i32, i32) {
    %c0_i32 = arith.constant 0 : i32
    %c0_i32_0 = arith.constant 0 : i32
    %c0_i32_1 = arith.constant 0 : i32
    return %arg0, %c0_i32, %c0_i32_0 : i32, i32, i32
  }
  func.func @transform_15(%arg0: i32, %arg1: i32) -> (i32, i32, i32) {
    %c0_i32 = arith.constant 0 : i32
    %c0_i32_0 = arith.constant 0 : i32
    return %arg0, %c0_i32, %arg1 : i32, i32, i32
  }
}

</mosaic_0001>

<llo_original>
// kernel: sub.17
$region0: #{sub.17}
  #allocation0 [shape = 's32[1]{0}', space=sflag, size = 0x4, scoped, tag = 'scoped memory for sub.17']
  %s0 = inlined_call_operand.vmem [shape: f32[2,5,3], index: 0, kind: input, shape index: {}]
  %s1 = inlined_call_operand.vmem [shape: f32[2,16,5,3], index: 1, kind: output, shape index: {}]
  // Predicated region
  $region2: #{sub.17} parent=0 // pred_check
    _
  $region3: #{sub.17} parent=0 // pred_check_branch
    %3 = sbr.rel (0) target = $region5
  $region4: #{sub.17} parent=0 // pred_region
    _
  $region5: #{sub.17} parent=0 // pred_fallthru
    _
  %v4 = vld [vmem:[%s0] ss:$0 sm:$0xff]
  %6 = vbcast.lane.b32.xlu0 %v4, 256
  %v7 = vpop.permute.xlu0 %6
  %8 = vst [vmem:[%s1] sm:$0x3] %v7
  %s9 = scalar_lea.vmem %s0, 4
  %v10 = vld [vmem:[%s9] ss:$0 sm:$0xff]
  %12 = vbcast.lane.b32.xlu0 %v10, 256
  %v13 = vpop.permute.xlu0 %12
  %s14 = scalar_lea.vmem %s1, 6
  %15 = vst [vmem:[%s14] sm:$0x3] %v13
  %s16 = scalar_lea.vmem %s0, 8
  %v17 = vld [vmem:[%s16] ss:$0 sm:$0xff]
  %19 = vbcast.lane.b32.xlu0 %v17, 256
  %v20 = vpop.permute.xlu0 %19
  %s21 = scalar_lea.vmem %s1, 12
  %22 = vst [vmem:[%s21] sm:$0x3] %v20
  %s23 = scalar_lea.vmem %s0, 12
  %v24 = vld [vmem:[%s23] ss:$0 sm:$0xff]
  %26 = vbcast.lane.b32.xlu0 %v24, 256
  %v27 = vpop.permute.xlu0 %26
  %s28 = scalar_lea.vmem %s1, 18
  %29 = vst [vmem:[%s28] sm:$0x3] %v27
  %s30 = scalar_lea.vmem %s0, 16
  %v31 = vld [vmem:[%s30] ss:$0 sm:$0xff]
  %33 = vbcast.lane.b32.xlu0 %v31, 256
  %v34 = vpop.permute.xlu0 %33
  %s35 = scalar_lea.vmem %s1, 24
  %36 = vst [vmem:[%s35] sm:$0x3] %v34
  %s37 = scalar_lea.vmem %s0, 1
  %v38 = vld [vmem:[%s37] ss:$0 sm:$0xff]
  %40 = vbcast.lane.b32.xlu0 %v38, 256
  %v41 = vpop.permute.xlu0 %40
  %s42 = scalar_lea.vmem %s1, 2
  %43 = vst [vmem:[%s42] sm:$0x3] %v41
  %s44 = scalar_lea.vmem %s0, 4
  %s45 = scalar_lea.vmem %s44, 1
  %v46 = vld [vmem:[%s45] ss:$0 sm:$0xff]
  %48 = vbcast.lane.b32.xlu0 %v46, 256
  %v49 = vpop.permute.xlu0 %48
  %s50 = scalar_lea.vmem %s1, 8
  %51 = vst [vmem:[%s50] sm:$0x3] %v49
  %s52 = scalar_lea.vmem %s0, 8
  %s53 = scalar_lea.vmem %s52, 1
  %v54 = vld [vmem:[%s53] ss:$0 sm:$0xff]
  %56 = vbcast.lane.b32.xlu0 %v54, 256
  %v57 = vpop.permute.xlu0 %56
  %s58 = scalar_lea.vmem %s1, 14
  %59 = vst [vmem:[%s58] sm:$0x3] %v57
  %s60 = scalar_lea.vmem %s0, 12
  %s61 = scalar_lea.vmem %s60, 1
  %v62 = vld [vmem:[%s61] ss:$0 sm:$0xff]
  %64 = vbcast.lane.b32.xlu0 %v62, 256
  %v65 = vpop.permute.xlu0 %64
  %s66 = scalar_lea.vmem %s1, 20
  %67 = vst [vmem:[%s66] sm:$0x3] %v65
  %s68 = scalar_lea.vmem %s0, 16
  %s69 = scalar_lea.vmem %s68, 1
  %v70 = vld [vmem:[%s69] ss:$0 sm:$0xff]
  %72 = vbcast.lane.b32.xlu0 %v70, 256
  %v73 = vpop.permute.xlu0 %72
  %s74 = scalar_lea.vmem %s1, 26
  %75 = vst [vmem:[%s74] sm:$0x3] %v73
  %s76 = scalar_lea.vmem %s0, 2
  %v77 = vld [vmem:[%s76] ss:$0 sm:$0xff]
  %79 = vbcast.lane.b32.xlu0 %v77, 256
  %v80 = vpop.permute.xlu0 %79
  %s81 = scalar_lea.vmem %s1, 4
  %82 = vst [vmem:[%s81] sm:$0x3] %v80
  %s83 = scalar_lea.vmem %s0, 4
  %s84 = scalar_lea.vmem %s83, 2
  %v85 = vld [vmem:[%s84] ss:$0 sm:$0xff]
  %87 = vbcast.lane.b32.xlu0 %v85, 256
  %v88 = vpop.permute.xlu0 %87
  %s89 = scalar_lea.vmem %s1, 10
  %90 = vst [vmem:[%s89] sm:$0x3] %v88
  %s91 = scalar_lea.vmem %s0, 8
  %s92 = scalar_lea.vmem %s91, 2
  %v93 = vld [vmem:[%s92] ss:$0 sm:$0xff]
  %95 = vbcast.lane.b32.xlu0 %v93, 256
  %v96 = vpop.permute.xlu0 %95
  %s97 = scalar_lea.vmem %s1, 16
  %98 = vst [vmem:[%s97] sm:$0x3] %v96
  %s99 = scalar_lea.vmem %s0, 12
  %s100 = scalar_lea.vmem %s99, 2
  %v101 = vld [vmem:[%s100] ss:$0 sm:$0xff]
  %103 = vbcast.lane.b32.xlu0 %v101, 256
  %v104 = vpop.permute.xlu0 %103
  %s105 = scalar_lea.vmem %s1, 22
  %106 = vst [vmem:[%s105] sm:$0x3] %v104
  %s107 = scalar_lea.vmem %s0, 16
  %s108 = scalar_lea.vmem %s107, 2
  %v109 = vld [vmem:[%s108] ss:$0 sm:$0xff]
  %111 = vbcast.lane.b32.xlu0 %v109, 256
  %v112 = vpop.permute.xlu0 %111
  %s113 = scalar_lea.vmem %s1, 28
  %114 = vst [vmem:[%s113] sm:$0x3] %v112

// kernel: fast_ensemble_forward.1
$region0: #{fast_ensemble_forward.1}
  #allocation0 [shape = 'u32[]', space=smem, size = 0x4, offset = 0x4, fixed_abs, tag = 'smem constant byte address 0x4 - core index']
  #allocation1 [shape = 'u32[144,128]{1,0:T(1,128)}', space=vmem, size = 0x12000, scoped, tag = 'internal scratch']
  %s0 = inlined_call_operand.vmem [shape: f32[6,3,128], index: 0, kind: input, shape index: {}]
  %s1 = inlined_call_operand.vmem [shape: f32[6,12,128], index: 1, kind: input, shape index: {}]
  %s2 = inlined_call_operand.vmem [shape: f32[6,32,3], index: 2, kind: input, shape index: {}]
  %s3 = inlined_call_operand.vmem [shape: f32[6,32,12], index: 3, kind: input, shape index: {}]
  %s4 = inlined_call_operand.vmem [shape: f32[6,32,1], index: 4, kind: input, shape index: {}]
  %s5 = inlined_call_operand.vmem [shape: f32[6,17,32], index: 5, kind: input, shape index: {}]
  %s6 = inlined_call_operand.vmem [shape: f32[6,17,1], index: 6, kind: input, shape index: {}]
  %s7 = inlined_call_operand.vmem [shape: f32[6,32,17], index: 7, kind: input, shape index: {}]
  %s8 = inlined_call_operand.vmem [shape: f32[6,32,3], index: 8, kind: input, shape index: {}]
  %s9 = inlined_call_operand.vmem [shape: f32[6,32,12], index: 9, kind: input, shape index: {}]
  %s10 = inlined_call_operand.vmem [shape: f32[6,32,1], index: 10, kind: input, shape index: {}]
  %s11 = inlined_call_operand.vmem [shape: f32[6,32,32], index: 11, kind: input, shape index: {}]
  %s12 = inlined_call_operand.vmem [shape: f32[6,32,1], index: 12, kind: input, shape index: {}]
  %s13 = inlined_call_operand.vmem [shape: f32[6,1,32], index: 13, kind: input, shape index: {}]
  %s14 = inlined_call_operand.vmem [shape: f32[6,1,1], index: 14, kind: input, shape index: {}]
  %s15 = inlined_call_operand.vmem [shape: f32[6,1,128], index: 15, kind: output, shape index: {}]
  %s16 = sld [smem:[#allocation0]]
  $region93: #{fast_ensemble_forward.1} parent=0
    _
  %s18 = ssub.s32 1, %s16
  %s19 = scalar_select 0, %s18, %s16
  loop: start=0, step=1, limit=8
  $region2: #{fast_ensemble_forward.1} parent=0 // loop_pre_header
    _
  $region3: #{fast_ensemble_forward.1} parent=0 // loop_header
    %s21 = sphi 0, %s25
    %p22 = scmp.ge.s32.totalorder %s21, 8
    %s28 = sphi 0, %s40
    %s29 = sphi 0, %s36
    %s30 = sphi 0, %s28
    %s31 = sphi 0, %s29
    %s32 = sphi 0, %s30
    %s33 = sphi 0, %s31
    %s45 = sphi 0, %s47
    %s48 = sphi 0, %s45
    %s49 = sphi 0, %s48
    %s65 = sphi 0, %s49
    %s73 = sphi 0, %s75
    %s76 = sphi 0, %s73
    %s77 = sphi 0, %s76
    %s93 = sphi 0, %s77
    %s99 = sphi 0, %s101
    %s102 = sphi 0, %s99
    %s103 = sphi 0, %s102
    %s119 = sphi 0, %s103
    %s125 = sphi 0, %s127
    %s128 = sphi 0, %s125
    %s129 = sphi 0, %s128
    %s145 = sphi 0, %s129
    %s151 = sphi 0, %s153
    %s154 = sphi 0, %s151
    %s155 = sphi 0, %s154
    %s171 = sphi 0, %s155
    %s177 = sphi 0, %s179
    %s180 = sphi 0, %s177
    %s181 = sphi 0, %s180
    %s197 = sphi 0, %s181
    %s203 = sphi 0, %s205
    %s206 = sphi 0, %s203
    %s207 = sphi 0, %s206
    %s223 = sphi 0, %s207
    %s229 = sphi 0, %s231
    %s232 = sphi 0, %s229
    %s233 = sphi 0, %s232
    %s249 = sphi 0, %s233
    %s255 = sphi 0, %s257
    %s258 = sphi 0, %s255
    %s259 = sphi 0, %s258
    %s275 = sphi 0, %s259
    %s281 = sphi 0, %s283
    %s284 = sphi 0, %s281
    %s285 = sphi 0, %s284
    %s301 = sphi 0, %s285
    %s307 = sphi 0, %s309
    %s310 = sphi 0, %s307
    %s311 = sphi 0, %s310
    %s327 = sphi 0, %s311
    %s333 = sphi 0, %s335
    %s336 = sphi 0, %s333
    %s337 = sphi 0, %s336
    %s353 = sphi 0, %s337
    %s359 = sphi 0, %s361
    %s362 = sphi 0, %s359
    %s363 = sphi 0, %s362
    %s379 = sphi 0, %s363
    %s385 = sphi 0, %s387
    %s388 = sphi 0, %s385
    %s389 = sphi 0, %s388
    %s405 = sphi 0, %s389
    %s411 = sphi 0, %s413
    %s414 = sphi 0, %s411
    %s415 = sphi 0, %s414
    %s431 = sphi 0, %s415
    %s439 = sphi 0, %s441
    %s442 = sphi 0, %s439
    %s443 = sphi 0, %s442
    %s459 = sphi 0, %s443
  $region4: #{fast_ensemble_forward.1} parent=0 // loop_header_branch
    %24 = sbr.rel (%p22) target = $region8
  $region5: #{fast_ensemble_forward.1} parent=0 // loop_body
    %s26 = ssub.s32 %s21, 1
    %s27 = ssub.s32 %s21, 2
    %s34 = sadd.s32 1, %s29
    %p35 = scmp.ge.s32.totalorder %s34, 1
    %s36 = scalar_select %p35, 0, %s34
    %s37 = sadd.s32 1, %s28
    %s38 = scalar_select %p35, %s37, %s28
    %p39 = scmp.ge.s32.totalorder %s38, 6
    %s40 = scalar_select %p39, 0, %s38
    %s41 = ssub.s32 %s28, %s40
    %s42 = ssub.s32 %s29, %s36
    %s43 = sor.u32 %s41, %s42
    %p44 = scmp.eq.s32.totalorder %s43, 0
    %s46 = sadd.s32 %s45, 1
    %s47 = scalar_select %p44, %s45, %s46
    %p50 = pneg %p44
    %p51 = scmp.eq.s32.totalorder %s21, 5
    %p52 = por %p50, %p51
    %p53 = scmp.ne.s32.totalorder %s45, %s48
    %p54 = scmp.eq.s32.totalorder %s21, 0
    %p55 = por %p53, %p54
    %p56 = scmp.ne.s32.totalorder %s45, %s48
    %p57 = scmp.eq.s32.totalorder %s26, 5
    %p58 = por %p56, %p57
    %p59 = scmp.ne.s32.totalorder %s48, %s49
    %p60 = scmp.eq.s32.totalorder %s26, 0
    %p61 = por %p59, %p60
    %p62 = scmp.ne.s32.totalorder %s48, %s49
    %p63 = scmp.eq.s32.totalorder %s27, 5
    %p64 = por %p62, %p63
    %p66 = scmp.ne.s32.totalorder %s49, %s65
    %p67 = scmp.eq.s32.totalorder %s27, 0
    %p68 = por %p66, %p67
    %s69 = ssub.s32 %s28, %s40
    %s70 = ssub.s32 %s29, %s36
    %s71 = sor.u32 %s69, %s70
    %p72 = scmp.eq.s32.totalorder %s71, 0
    %s74 = sadd.s32 %s73, 1
    %s75 = scalar_select %p72, %s73, %s74
    %p78 = pneg %p72
    %p79 = scmp.eq.s32.totalorder %s21, 5
    %p80 = por %p78, %p79
    %p81 = scmp.ne.s32.totalorder %s73, %s76
    %p82 = scmp.eq.s32.totalorder %s21, 0
    %p83 = por %p81, %p82
    %p84 = scmp.ne.s32.totalorder %s73, %s76
    %p85 = scmp.eq.s32.totalorder %s26, 5
    %p86 = por %p84, %p85
    %p87 = scmp.ne.s32.totalorder %s76, %s77
    %p88 = scmp.eq.s32.totalorder %s26, 0
    %p89 = por %p87, %p88
    %p90 = scmp.ne.s32.totalorder %s76, %s77
    %p91 = scmp.eq.s32.totalorder %s27, 5
    %p92 = por %p90, %p91
    %p94 = scmp.ne.s32.totalorder %s77, %s93
    %p95 = scmp.eq.s32.totalorder %s27, 0
    %p96 = por %p94, %p95
    %s97 = ssub.s32 %s28, %s40
    %p98 = scmp.eq.s32.totalorder %s97, 0
    %s100 = sadd.s32 %s99, 1
    %s101 = scalar_select %p98, %s99, %s100
    %p104 = pneg %p98
    %p105 = scmp.eq.s32.totalorder %s21, 5
    %p106 = por %p104, %p105
    %p107 = scmp.ne.s32.totalorder %s99, %s102
    %p108 = scmp.eq.s32.totalorder %s21, 0
    %p109 = por %p107, %p108
    %p110 = scmp.ne.s32.totalorder %s99, %s102
    %p111 = scmp.eq.s32.totalorder %s26, 5
    %p112 = por %p110, %p111
    %p113 = scmp.ne.s32.totalorder %s102, %s103
    %p114 = scmp.eq.s32.totalorder %s26, 0
    %p115 = por %p113, %p114
    %p116 = scmp.ne.s32.totalorder %s102, %s103
    %p117 = scmp.eq.s32.totalorder %s27, 5
    %p118 = por %p116, %p117
    %p120 = scmp.ne.s32.totalorder %s103, %s119
    %p121 = scmp.eq.s32.totalorder %s27, 0
    %p122 = por %p120, %p121
    %s123 = ssub.s32 %s28, %s40
    %p124 = scmp.eq.s32.totalorder %s123, 0
    %s126 = sadd.s32 %s125, 1
    %s127 = scalar_select %p124, %s125, %s126
    %p130 = pneg %p124
    %p131 = scmp.eq.s32.totalorder %s21, 5
    %p132 = por %p130, %p131
    %p133 = scmp.ne.s32.totalorder %s125, %s128
    %p134 = scmp.eq.s32.totalorder %s21, 0
    %p135 = por %p133, %p134
    %p136 = scmp.ne.s32.totalorder %s125, %s128
    %p137 = scmp.eq.s32.totalorder %s26, 5
    %p138 = por %p136, %p137
    %p139 = scmp.ne.s32.totalorder %s128, %s129
    %p140 = scmp.eq.s32.totalorder %s26, 0
    %p141 = por %p139, %p140
    %p142 = scmp.ne.s32.totalorder %s128, %s129
    %p143 = scmp.eq.s32.totalorder %s27, 5
    %p144 = por %p142, %p143
    %p146 = scmp.ne.s32.totalorder %s129, %s145
    %p147 = scmp.eq.s32.totalorder %s27, 0
    %p148 = por %p146, %p147
    %s149 = ssub.s32 %s28, %s40
    %p150 = scmp.eq.s32.totalorder %s149, 0
    %s152 = sadd.s32 %s151, 1
    %s153 = scalar_select %p150, %s151, %s152
    %p156 = pneg %p150
    %p157 = scmp.eq.s32.totalorder %s21, 5
    %p158 = por %p156, %p157
    %p159 = scmp.ne.s32.totalorder %s151, %s154
    %p160 = scmp.eq.s32.totalorder %s21, 0
    %p161 = por %p159, %p160
    %p162 = scmp.ne.s32.totalorder %s151, %s154
    %p163 = scmp.eq.s32.totalorder %s26, 5
    %p164 = por %p162, %p163
    %p165 = scmp.ne.s32.totalorder %s154, %s155
    %p166 = scmp.eq.s32.totalorder %s26, 0
    %p167 = por %p165, %p166
    %p168 = scmp.ne.s32.totalorder %s154, %s155
    %p169 = scmp.eq.s32.totalorder %s27, 5
    %p170 = por %p168, %p169
    %p172 = scmp.ne.s32.totalorder %s155, %s171
    %p173 = scmp.eq.s32.totalorder %s27, 0
    %p174 = por %p172, %p173
    %s175 = ssub.s32 %s28, %s40
    %p176 = scmp.eq.s32.totalorder %s175, 0
    %s178 = sadd.s32 %s177, 1
    %s179 = scalar_select %p176, %s177, %s178
    %p182 = pneg %p176
    %p183 = scmp.eq.s32.totalorder %s21, 5
    %p184 = por %p182, %p183
    %p185 = scmp.ne.s32.totalorder %s177, %s180
    %p186 = scmp.eq.s32.totalorder %s21, 0
    %p187 = por %p185, %p186
    %p188 = scmp.ne.s32.totalorder %s177, %s180
    %p189 = scmp.eq.s32.totalorder %s26, 5
    %p190 = por %p188, %p189
    %p191 = scmp.ne.s32.totalorder %s180, %s181
    %p192 = scmp.eq.s32.totalorder %s26, 0
    %p193 = por %p191, %p192
    %p194 = scmp.ne.s32.totalorder %s180, %s181
    %p195 = scmp.eq.s32.totalorder %s27, 5
    %p196 = por %p194, %p195
    %p198 = scmp.ne.s32.totalorder %s181, %s197
    %p199 = scmp.eq.s32.totalorder %s27, 0
    %p200 = por %p198, %p199
    %s201 = ssub.s32 %s28, %s40
    %p202 = scmp.eq.s32.totalorder %s201, 0
    %s204 = sadd.s32 %s203, 1
    %s205 = scalar_select %p202, %s203, %s204
    %p208 = pneg %p202
    %p209 = scmp.eq.s32.totalorder %s21, 5
    %p210 = por %p208, %p209
    %p211 = scmp.ne.s32.totalorder %s203, %s206
    %p212 = scmp.eq.s32.totalorder %s21, 0
    %p213 = por %p211, %p212
    %p214 = scmp.ne.s32.totalorder %s203, %s206
    %p215 = scmp.eq.s32.totalorder %s26, 5
    %p216 = por %p214, %p215
    %p217 = scmp.ne.s32.totalorder %s206, %s207
    %p218 = scmp.eq.s32.totalorder %s26, 0
    %p219 = por %p217, %p218
    %p220 = scmp.ne.s32.totalorder %s206, %s207
    %p221 = scmp.eq.s32.totalorder %s27, 5
    %p222 = por %p220, %p221
    %p224 = scmp.ne.s32.totalorder %s207, %s223
    %p225 = scmp.eq.s32.totalorder %s27, 0
    %p226 = por %p224, %p225
    %s227 = ssub.s32 %s28, %s40
    %p228 = scmp.eq.s32.totalorder %s227, 0
    %s230 = sadd.s32 %s229, 1
    %s231 = scalar_select %p228, %s229, %s230
    %p234 = pneg %p228
    %p235 = scmp.eq.s32.totalorder %s21, 5
    %p236 = por %p234, %p235
    %p237 = scmp.ne.s32.totalorder %s229, %s232
    %p238 = scmp.eq.s32.totalorder %s21, 0
    %p239 = por %p237, %p238
    %p240 = scmp.ne.s32.totalorder %s229, %s232
    %p241 = scmp.eq.s32.totalorder %s26, 5
    %p242 = por %p240, %p241
    %p243 = scmp.ne.s32.totalorder %s232, %s233
    %p244 = scmp.eq.s32.totalorder %s26, 0
    %p245 = por %p243, %p244
    %p246 = scmp.ne.s32.totalorder %s232, %s233
    %p247 = scmp.eq.s32.totalorder %s27, 5
    %p248 = por %p246, %p247
    %p250 = scmp.ne.s32.totalorder %s233, %s249
    %p251 = scmp.eq.s32.totalorder %s27, 0
    %p252 = por %p250, %p251
    %s253 = ssub.s32 %s28, %s40
    %p254 = scmp.eq.s32.totalorder %s253, 0
    %s256 = sadd.s32 %s255, 1
    %s257 = scalar_select %p254, %s255, %s256
    %p260 = pneg %p254
    %p261 = scmp.eq.s32.totalorder %s21, 5
    %p262 = por %p260, %p261
    %p263 = scmp.ne.s32.totalorder %s255, %s258
    %p264 = scmp.eq.s32.totalorder %s21, 0
    %p265 = por %p263, %p264
    %p266 = scmp.ne.s32.totalorder %s255, %s258
    %p267 = scmp.eq.s32.totalorder %s26, 5
    %p268 = por %p266, %p267
    %p269 = scmp.ne.s32.totalorder %s258, %s259
    %p270 = scmp.eq.s32.totalorder %s26, 0
    %p271 = por %p269, %p270
    %p272 = scmp.ne.s32.totalorder %s258, %s259
    %p273 = scmp.eq.s32.totalorder %s27, 5
    %p274 = por %p272, %p273
    %p276 = scmp.ne.s32.totalorder %s259, %s275
    %p277 = scmp.eq.s32.totalorder %s27, 0
    %p278 = por %p276, %p277
    %s279 = ssub.s32 %s28, %s40
    %p280 = scmp.eq.s32.totalorder %s279, 0
    %s282 = sadd.s32 %s281, 1
    %s283 = scalar_select %p280, %s281, %s282
    %p286 = pneg %p280
    %p287 = scmp.eq.s32.totalorder %s21, 5
    %p288 = por %p286, %p287
    %p289 = scmp.ne.s32.totalorder %s281, %s284
    %p290 = scmp.eq.s32.totalorder %s21, 0
    %p291 = por %p289, %p290
    %p292 = scmp.ne.s32.totalorder %s281, %s284
    %p293 = scmp.eq.s32.totalorder %s26, 5
    %p294 = por %p292, %p293
    %p295 = scmp.ne.s32.totalorder %s284, %s285
    %p296 = scmp.eq.s32.totalorder %s26, 0
    %p297 = por %p295, %p296
    %p298 = scmp.ne.s32.totalorder %s284, %s285
    %p299 = scmp.eq.s32.totalorder %s27, 5
    %p300 = por %p298, %p299
    %p302 = scmp.ne.s32.totalorder %s285, %s301
    %p303 = scmp.eq.s32.totalorder %s27, 0
    %p304 = por %p302, %p303
    %s305 = ssub.s32 %s28, %s40
    %p306 = scmp.eq.s32.totalorder %s305, 0
    %s308 = sadd.s32 %s307, 1
    %s309 = scalar_select %p306, %s307, %s308
    %p312 = pneg %p306
    %p313 = scmp.eq.s32.totalorder %s21, 5
    %p314 = por %p312, %p313
    %p315 = scmp.ne.s32.totalorder %s307, %s310
    %p316 = scmp.eq.s32.totalorder %s21, 0
    %p317 = por %p315, %p316
    %p318 = scmp.ne.s32.totalorder %s307, %s310
    %p319 = scmp.eq.s32.totalorder %s26, 5
    %p320 = por %p318, %p319
    %p321 = scmp.ne.s32.totalorder %s310, %s311
    %p322 = scmp.eq.s32.totalorder %s26, 0
    %p323 = por %p321, %p322
    %p324 = scmp.ne.s32.totalorder %s310, %s311
    %p325 = scmp.eq.s32.totalorder %s27, 5
    %p326 = por %p324, %p325
    %p328 = scmp.ne.s32.totalorder %s311, %s327
    %p329 = scmp.eq.s32.totalorder %s27, 0
    %p330 = por %p328, %p329
    %s331 = ssub.s32 %s28, %s40
    %p332 = scmp.eq.s32.totalorder %s331, 0
    %s334 = sadd.s32 %s333, 1
    %s335 = scalar_select %p332, %s333, %s334
    %p338 = pneg %p332
    %p339 = scmp.eq.s32.totalorder %s21, 5
    %p340 = por %p338, %p339
    %p341 = scmp.ne.s32.totalorder %s333, %s336
    %p342 = scmp.eq.s32.totalorder %s21, 0
    %p343 = por %p341, %p342
    %p344 = scmp.ne.s32.totalorder %s333, %s336
    %p345 = scmp.eq.s32.totalorder %s26, 5
    %p346 = por %p344, %p345
    %p347 = scmp.ne.s32.totalorder %s336, %s337
    %p348 = scmp.eq.s32.totalorder %s26, 0
    %p349 = por %p347, %p348
    %p350 = scmp.ne.s32.totalorder %s336, %s337
    %p351 = scmp.eq.s32.totalorder %s27, 5
    %p352 = por %p350, %p351
    %p354 = scmp.ne.s32.totalorder %s337, %s353
    %p355 = scmp.eq.s32.totalorder %s27, 0
    %p356 = por %p354, %p355
    %s357 = ssub.s32 %s28, %s40
    %p358 = scmp.eq.s32.totalorder %s357, 0
    %s360 = sadd.s32 %s359, 1
    %s361 = scalar_select %p358, %s359, %s360
    %p364 = pneg %p358
    %p365 = scmp.eq.s32.totalorder %s21, 5
    %p366 = por %p364, %p365
    %p367 = scmp.ne.s32.totalorder %s359, %s362
    %p368 = scmp.eq.s32.totalorder %s21, 0
    %p369 = por %p367, %p368
    %p370 = scmp.ne.s32.totalorder %s359, %s362
    %p371 = scmp.eq.s32.totalorder %s26, 5
    %p372 = por %p370, %p371
    %p373 = scmp.ne.s32.totalorder %s362, %s363
    %p374 = scmp.eq.s32.totalorder %s26, 0
    %p375 = por %p373, %p374
    %p376 = scmp.ne.s32.totalorder %s362, %s363
    %p377 = scmp.eq.s32.totalorder %s27, 5
    %p378 = por %p376, %p377
    %p380 = scmp.ne.s32.totalorder %s363, %s379
    %p381 = scmp.eq.s32.totalorder %s27, 0
    %p382 = por %p380, %p381
    %s383 = ssub.s32 %s28, %s40
    %p384 = scmp.eq.s32.totalorder %s383, 0
    %s386 = sadd.s32 %s385, 1
    %s387 = scalar_select %p384, %s385, %s386
    %p390 = pneg %p384
    %p391 = scmp.eq.s32.totalorder %s21, 5
    %p392 = por %p390, %p391
    %p393 = scmp.ne.s32.totalorder %s385, %s388
    %p394 = scmp.eq.s32.totalorder %s21, 0
    %p395 = por %p393, %p394
    %p396 = scmp.ne.s32.totalorder %s385, %s388
    %p397 = scmp.eq.s32.totalorder %s26, 5
    %p398 = por %p396, %p397
    %p399 = scmp.ne.s32.totalorder %s388, %s389
    %p400 = scmp.eq.s32.totalorder %s26, 0
    %p401 = por %p399, %p400
    %p402 = scmp.ne.s32.totalorder %s388, %s389
    %p403 = scmp.eq.s32.totalorder %s27, 5
    %p404 = por %p402, %p403
    %p406 = scmp.ne.s32.totalorder %s389, %s405
    %p407 = scmp.eq.s32.totalorder %s27, 0
    %p408 = por %p406, %p407
    %s409 = ssub.s32 %s28, %s40
    %p410 = scmp.eq.s32.totalorder %s409, 0
    %s412 = sadd.s32 %s411, 1
    %s413 = scalar_select %p410, %s411, %s412
    %p416 = pneg %p410
    %p417 = scmp.eq.s32.totalorder %s21, 5
    %p418 = por %p416, %p417
    %p419 = scmp.ne.s32.totalorder %s411, %s414
    %p420 = scmp.eq.s32.totalorder %s21, 0
    %p421 = por %p419, %p420
    %p422 = scmp.ne.s32.totalorder %s411, %s414
    %p423 = scmp.eq.s32.totalorder %s26, 5
    %p424 = por %p422, %p423
    %p425 = scmp.ne.s32.totalorder %s414, %s415
    %p426 = scmp.eq.s32.totalorder %s26, 0
    %p427 = por %p425, %p426
    %p428 = scmp.ne.s32.totalorder %s414, %s415
    %p429 = scmp.eq.s32.totalorder %s27, 5
    %p430 = por %p428, %p429
    %p432 = scmp.ne.s32.totalorder %s415, %s431
    %p433 = scmp.eq.s32.totalorder %s27, 0
    %p434 = por %p432, %p433
    %s435 = ssub.s32 %s28, %s40
    %s436 = ssub.s32 %s29, %s36
    %s437 = sor.u32 %s435, %s436
    %p438 = scmp.eq.s32.totalorder %s437, 0
    %s440 = sadd.s32 %s439, 1
    %s441 = scalar_select %p438, %s439, %s440
    %p444 = pneg %p438
    %p445 = scmp.eq.s32.totalorder %s21, 5
    %p446 = por %p444, %p445
    %p447 = scmp.ne.s32.totalorder %s439, %s442
    %p448 = scmp.eq.s32.totalorder %s21, 0
    %p449 = por %p447, %p448
    %p450 = scmp.ne.s32.totalorder %s439, %s442
    %p451 = scmp.eq.s32.totalorder %s26, 5
    %p452 = por %p450, %p451
    %p453 = scmp.ne.s32.totalorder %s442, %s443
    %p454 = scmp.eq.s32.totalorder %s26, 0
    %p455 = por %p453, %p454
    %p456 = scmp.ne.s32.totalorder %s442, %s443
    %p457 = scmp.eq.s32.totalorder %s27, 5
    %p458 = por %p456, %p457
    %p460 = scmp.ne.s32.totalorder %s443, %s459
    %p461 = scmp.eq.s32.totalorder %s27, 0
    %p462 = por %p460, %p461
    %p463 = scmp.le.s32.totalorder 1, %s21
    %p464 = scmp.lt.s32.totalorder %s21, 7
    %p465 = pnand %p463, %p464
    %p466 = pneg %p465
    // Predicated region
    $region9: #{fast_ensemble_forward.1} parent=5 // pred_check
      _
    $region10: #{fast_ensemble_forward.1} parent=5 // pred_check_branch
      %468 = sbr.rel (%p465) target = $region12
    $region11: #{fast_ensemble_forward.1} parent=5 // pred_region
      %s469 = ssub.s32 %s21, 1
    $region12: #{fast_ensemble_forward.1} parent=5 // pred_fallthru
      _
    %p470 = scmp.lt.s32.totalorder %s21, 6
    // Predicated region
    $region13: #{fast_ensemble_forward.1} parent=5 // pred_check
      %p471 = pneg %p470
    $region14: #{fast_ensemble_forward.1} parent=5 // pred_check_branch
      %473 = sbr.rel (%p471) target = $region16
    $region15: #{fast_ensemble_forward.1} parent=5 // pred_region
      // Predicated region
      $region17: #{fast_ensemble_forward.1} parent=15 // pred_check
        %p474 = pneg %p55
      $region18: #{fast_ensemble_forward.1} parent=15 // pred_check_branch
        %476 = sbr.rel (%p474) target = $region20
      $region19: #{fast_ensemble_forward.1} parent=15 // pred_region
        %p477 = scmp.lt.s32.totalorder %s28, 5
        %s478 = scalar_select %p477, %s28, 5
        %p479 = scmp.lt.s32.totalorder %s29, 0
        %s480 = scalar_select %p479, %s29, 0
        %s481 = sadd.s32 %s480, %s478
        %s482 = smul.addr %s481, 4
        %s483 = scalar_lea.vmem %s0, %s482
      $region20: #{fast_ensemble_forward.1} parent=15 // pred_fallthru
        _
      // Predicated region
      $region21: #{fast_ensemble_forward.1} parent=15 // pred_check
        %p484 = pneg %p83
      $region22: #{fast_ensemble_forward.1} parent=15 // pred_check_branch
        %486 = sbr.rel (%p484) target = $region24
      $region23: #{fast_ensemble_forward.1} parent=15 // pred_region
        %p487 = scmp.lt.s32.totalorder %s28, 5
        %s488 = scalar_select %p487, %s28, 5
        %p489 = scmp.lt.s32.totalorder %s29, 0
        %s490 = scalar_select %p489, %s29, 0
        %s491 = smul.addr %s488, 2
        %s492 = sadd.s32 %s490, %s491
        %s493 = smul.addr %s492, 8
        %s494 = scalar_lea.vmem %s1, %s493
      $region24: #{fast_ensemble_forward.1} parent=15 // pred_fallthru
        _
      // Predicated region
      $region25: #{fast_ensemble_forward.1} parent=15 // pred_check
        %p495 = pneg %p109
      $region26: #{fast_ensemble_forward.1} parent=15 // pred_check_branch
        %497 = sbr.rel (%p495) target = $region28
      $region27: #{fast_ensemble_forward.1} parent=15 // pred_region
        %p498 = scmp.lt.s32.totalorder %s28, 5
        %s499 = scalar_select %p498, %s28, 5
        %s500 = smul.addr %s499, 4
        %s501 = smul.addr %s500, 8
        %s502 = scalar_lea.vmem %s2, %s501
      $region28: #{fast_ensemble_forward.1} parent=15 // pred_fallthru
        _
      // Predicated region
      $region29: #{fast_ensemble_forward.1} parent=15 // pred_check
        %p503 = pneg %p135
      $region30: #{fast_ensemble_forward.1} parent=15 // pred_check_branch
        %505 = sbr.rel (%p503) target = $region32
      $region31: #{fast_ensemble_forward.1} parent=15 // pred_region
        %p506 = scmp.lt.s32.totalorder %s28, 5
        %s507 = scalar_select %p506, %s28, 5
        %s508 = smul.addr %s507, 4
        %s509 = smul.addr %s508, 8
        %s510 = scalar_lea.vmem %s3, %s509
      $region32: #{fast_ensemble_forward.1} parent=15 // pred_fallthru
        _
      // Predicated region
      $region33: #{fast_ensemble_forward.1} parent=15 // pred_check
        %p511 = pneg %p161
      $region34: #{fast_ensemble_forward.1} parent=15 // pred_check_branch
        %513 = sbr.rel (%p511) target = $region36
      $region35: #{fast_ensemble_forward.1} parent=15 // pred_region
        %p514 = scmp.lt.s32.totalorder %s28, 5
        %s515 = scalar_select %p514, %s28, 5
        %s516 = smul.addr %s515, 4
        %s517 = smul.addr %s516, 8
        %s518 = scalar_lea.vmem %s4, %s517
      $region36: #{fast_ensemble_forward.1} parent=15 // pred_fallthru
        _
      // Predicated region
      $region37: #{fast_ensemble_forward.1} parent=15 // pred_check
        %p519 = pneg %p187
      $region38: #{fast_ensemble_forward.1} parent=15 // pred_check_branch
        %521 = sbr.rel (%p519) target = $region40
      $region39: #{fast_ensemble_forward.1} parent=15 // pred_region
        %p522 = scmp.lt.s32.totalorder %s28, 5
        %s523 = scalar_select %p522, %s28, 5
        %s524 = smul.addr %s523, 3
        %s525 = smul.addr %s524, 8
        %s526 = scalar_lea.vmem %s5, %s525
      $region40: #{fast_ensemble_forward.1} parent=15 // pred_fallthru
        _
      // Predicated region
      $region41: #{fast_ensemble_forward.1} parent=15 // pred_check
        %p527 = pneg %p213
      $region42: #{fast_ensemble_forward.1} parent=15 // pred_check_branch
        %529 = sbr.rel (%p527) target = $region44
      $region43: #{fast_ensemble_forward.1} parent=15 // pred_region
        %p530 = scmp.lt.s32.totalorder %s28, 5
        %s531 = scalar_select %p530, %s28, 5
        %s532 = smul.addr %s531, 3
        %s533 = smul.addr %s532, 8
        %s534 = scalar_lea.vmem %s6, %s533
      $region44: #{fast_ensemble_forward.1} parent=15 // pred_fallthru
        _
      // Predicated region
      $region45: #{fast_ensemble_forward.1} parent=15 // pred_check
        %p535 = pneg %p239
      $region46: #{fast_ensemble_forward.1} parent=15 // pred_check_branch
        %537 = sbr.rel (%p535) target = $region48
      $region47: #{fast_ensemble_forward.1} parent=15 // pred_region
        %p538 = scmp.lt.s32.totalorder %s28, 5
        %s539 = scalar_select %p538, %s28, 5
        %s540 = smul.addr %s539, 4
        %s541 = smul.addr %s540, 8
        %s542 = scalar_lea.vmem %s7, %s541
      $region48: #{fast_ensemble_forward.1} parent=15 // pred_fallthru
        _
      // Predicated region
      $region49: #{fast_ensemble_forward.1} parent=15 // pred_check
        %p543 = pneg %p265
      $region50: #{fast_ensemble_forward.1} parent=15 // pred_check_branch
        %545 = sbr.rel (%p543) target = $region52
      $region51: #{fast_ensemble_forward.1} parent=15 // pred_region
        %p546 = scmp.lt.s32.totalorder %s28, 5
        %s547 = scalar_select %p546, %s28, 5
        %s548 = smul.addr %s547, 4
        %s549 = smul.addr %s548, 8
        %s550 = scalar_lea.vmem %s8, %s549
      $region52: #{fast_ensemble_forward.1} parent=15 // pred_fallthru
        _
      // Predicated region
      $region53: #{fast_ensemble_forward.1} parent=15 // pred_check
        %p551 = pneg %p291
      $region54: #{fast_ensemble_forward.1} parent=15 // pred_check_branch
        %553 = sbr.rel (%p551) target = $region56
      $region55: #{fast_ensemble_forward.1} parent=15 // pred_region
        %p554 = scmp.lt.s32.totalorder %s28, 5
        %s555 = scalar_select %p554, %s28, 5
        %s556 = smul.addr %s555, 4
        %s557 = smul.addr %s556, 8
        %s558 = scalar_lea.vmem %s9, %s557
      $region56: #{fast_ensemble_forward.1} parent=15 // pred_fallthru
        _
      // Predicated region
      $region57: #{fast_ensemble_forward.1} parent=15 // pred_check
        %p559 = pneg %p317
      $region58: #{fast_ensemble_forward.1} parent=15 // pred_check_branch
        %561 = sbr.rel (%p559) target = $region60
      $region59: #{fast_ensemble_forward.1} parent=15 // pred_region
        %p562 = scmp.lt.s32.totalorder %s28, 5
        %s563 = scalar_select %p562, %s28, 5
        %s564 = smul.addr %s563, 4
        %s565 = smul.addr %s564, 8
        %s566 = scalar_lea.vmem %s10, %s565
      $region60: #{fast_ensemble_forward.1} parent=15 // pred_fallthru
        _
      // Predicated region
      $region61: #{fast_ensemble_forward.1} parent=15 // pred_check
        %p567 = pneg %p343
      $region62: #{fast_ensemble_forward.1} parent=15 // pred_check_branch
        %569 = sbr.rel (%p567) target = $region64
      $region63: #{fast_ensemble_forward.1} parent=15 // pred_region
        %p570 = scmp.lt.s32.totalorder %s28, 5
        %s571 = scalar_select %p570, %s28, 5
        %s572 = smul.addr %s571, 4
        %s573 = smul.addr %s572, 8
        %s574 = scalar_lea.vmem %s11, %s573
      $region64: #{fast_ensemble_forward.1} parent=15 // pred_fallthru
        _
      // Predicated region
      $region65: #{fast_ensemble_forward.1} parent=15 // pred_check
        %p575 = pneg %p369
      $region66: #{fast_ensemble_forward.1} parent=15 // pred_check_branch
        %577 = sbr.rel (%p575) target = $region68
      $region67: #{fast_ensemble_forward.1} parent=15 // pred_region
        %p578 = scmp.lt.s32.totalorder %s28, 5
        %s579 = scalar_select %p578, %s28, 5
        %s580 = smul.addr %s579, 4
        %s581 = smul.addr %s580, 8
        %s582 = scalar_lea.vmem %s12, %s581
      $region68: #{fast_ensemble_forward.1} parent=15 // pred_fallthru
        _
      // Predicated region
      $region69: #{fast_ensemble_forward.1} parent=15 // pred_check
        %p583 = pneg %p395
      $region70: #{fast_ensemble_forward.1} parent=15 // pred_check_branch
        %585 = sbr.rel (%p583) target = $region72
      $region71: #{fast_ensemble_forward.1} parent=15 // pred_region
        %p586 = scmp.lt.s32.totalorder %s28, 5
        %s587 = scalar_select %p586, %s28, 5
        %s588 = scalar_lea.vmem %s13, %s587
      $region72: #{fast_ensemble_forward.1} parent=15 // pred_fallthru
        _
      // Predicated region
      $region73: #{fast_ensemble_forward.1} parent=15 // pred_check
        %p589 = pneg %p421
      $region74: #{fast_ensemble_forward.1} parent=15 // pred_check_branch
        %591 = sbr.rel (%p589) target = $region76
      $region75: #{fast_ensemble_forward.1} parent=15 // pred_region
        %p592 = scmp.lt.s32.totalorder %s28, 5
        %s593 = scalar_select %p592, %s28, 5
        %s594 = scalar_lea.vmem %s14, %s593
      $region76: #{fast_ensemble_forward.1} parent=15 // pred_fallthru
        _
    $region16: #{fast_ensemble_forward.1} parent=5 // pred_fallthru
      _
    %p595 = scmp.le.s32.totalorder 1, %s21
    %p596 = scmp.lt.s32.totalorder %s21, 7
    %p597 = pnand %p595, %p596
    %p598 = pneg %p597
    // Predicated region
    $region77: #{fast_ensemble_forward.1} parent=5 // pred_check
      _
    $region78: #{fast_ensemble_forward.1} parent=5 // pred_check_branch
      %600 = sbr.rel (%p597) target = $region80
    $region79: #{fast_ensemble_forward.1} parent=5 // pred_region
      %s601 = ssub.s32 %s21, 1
      %p602 = scmp.lt.s32.totalorder %s30, 5
      %s603 = scalar_select %p602, %s30, 5
      %p604 = scmp.lt.s32.totalorder %s31, 0
      %s605 = scalar_select %p604, %s31, 0
      %s606 = sadd.s32 %s605, %s603
      %s607 = smul.addr %s606, 4
      %s608 = scalar_lea.vmem %s0, %s607
      %p609 = pneg %p61
      %p610 = pneg %p58
      %p611 = scmp.lt.s32.totalorder %s30, 5
      %s612 = scalar_select %p611, %s30, 5
      %p613 = scmp.lt.s32.totalorder %s31, 0
      %s614 = scalar_select %p613, %s31, 0
      %s615 = smul.addr %s612, 2
      %s616 = sadd.s32 %s614, %s615
      %s617 = smul.addr %s616, 8
      %s618 = scalar_lea.vmem %s1, %s617
      %p619 = pneg %p89
      %p620 = pneg %p86
      %p621 = scmp.lt.s32.totalorder %s30, 5
      %s622 = scalar_select %p621, %s30, 5
      %s623 = smul.addr %s622, 4
      %s624 = smul.addr %s623, 8
      %s625 = scalar_lea.vmem %s2, %s624
      %p626 = pneg %p115
      %p627 = pneg %p112
      %p628 = scmp.lt.s32.totalorder %s30, 5
      %s629 = scalar_select %p628, %s30, 5
      %s630 = smul.addr %s629, 4
      %s631 = smul.addr %s630, 8
      %s632 = scalar_lea.vmem %s3, %s631
      %p633 = pneg %p141
      %p634 = pneg %p138
      %p635 = scmp.lt.s32.totalorder %s30, 5
      %s636 = scalar_select %p635, %s30, 5
      %s637 = smul.addr %s636, 4
      %s638 = smul.addr %s637, 8
      %s639 = scalar_lea.vmem %s4, %s638
      %p640 = pneg %p167
      %p641 = pneg %p164
      %p642 = scmp.lt.s32.totalorder %s30, 5
      %s643 = scalar_select %p642, %s30, 5
      %s644 = smul.addr %s643, 3
      %s645 = smul.addr %s644, 8
      %s646 = scalar_lea.vmem %s5, %s645
      %p647 = pneg %p193
      %p648 = pneg %p190
      %p649 = scmp.lt.s32.totalorder %s30, 5
      %s650 = scalar_select %p649, %s30, 5
      %s651 = smul.addr %s650, 3
      %s652 = smul.addr %s651, 8
      %s653 = scalar_lea.vmem %s6, %s652
      %p654 = pneg %p219
      %p655 = pneg %p216
      %p656 = scmp.lt.s32.totalorder %s30, 5
      %s657 = scalar_select %p656, %s30, 5
      %s658 = smul.addr %s657, 4
      %s659 = smul.addr %s658, 8
      %s660 = scalar_lea.vmem %s7, %s659
      %p661 = pneg %p245
      %p662 = pneg %p242
      %p663 = scmp.lt.s32.totalorder %s30, 5
      %s664 = scalar_select %p663, %s30, 5
      %s665 = smul.addr %s664, 4
      %s666 = smul.addr %s665, 8
      %s667 = scalar_lea.vmem %s8, %s666
      %p668 = pneg %p271
      %p669 = pneg %p268
      %p670 = scmp.lt.s32.totalorder %s30, 5
      %s671 = scalar_select %p670, %s30, 5
      %s672 = smul.addr %s671, 4
      %s673 = smul.addr %s672, 8
      %s674 = scalar_lea.vmem %s9, %s673
      %p675 = pneg %p297
      %p676 = pneg %p294
      %p677 = scmp.lt.s32.totalorder %s30, 5
      %s678 = scalar_select %p677, %s30, 5
      %s679 = smul.addr %s678, 4
      %s680 = smul.addr %s679, 8
      %s681 = scalar_lea.vmem %s10, %s680
      %p682 = pneg %p323
      %p683 = pneg %p320
      %p684 = scmp.lt.s32.totalorder %s30, 5
      %s685 = scalar_select %p684, %s30, 5
      %s686 = smul.addr %s685, 4
      %s687 = smul.addr %s686, 8
      %s688 = scalar_lea.vmem %s11, %s687
      %p689 = pneg %p349
      %p690 = pneg %p346
      %p691 = scmp.lt.s32.totalorder %s30, 5
      %s692 = scalar_select %p691, %s30, 5
      %s693 = smul.addr %s692, 4
      %s694 = smul.addr %s693, 8
      %s695 = scalar_lea.vmem %s12, %s694
      %p696 = pneg %p375
      %p697 = pneg %p372
      %p698 = scmp.lt.s32.totalorder %s30, 5
      %s699 = scalar_select %p698, %s30, 5
      %s700 = scalar_lea.vmem %s13, %s699
      %p701 = pneg %p401
      %p702 = pneg %p398
      %p703 = scmp.lt.s32.totalorder %s30, 5
      %s704 = scalar_select %p703, %s30, 5
      %s705 = scalar_lea.vmem %s14, %s704
      %p706 = pneg %p427
      %p707 = pneg %p424
      %p708 = pneg %p455
      %p709 = pneg %p452
      %p710 = scmp.lt.s32.totalorder %s30, 5
      %s711 = scalar_select %p710, %s30, 5
      %p712 = scmp.lt.s32.totalorder %s31, 0
      %s713 = scalar_select %p712, %s31, 0
      %s714 = sadd.s32 %s713, %s711
      %s715 = scalar_lea.vmem %s15, %s714
      %p716 = scmp.lt.s32.totalorder %s30, 5
      %s717 = scalar_select %p716, %s30, 5
      %p718 = scmp.lt.s32.totalorder %s31, 0
      %s719 = scalar_select %p718, %s31, 0
      %s720 = sadd.s32 %s719, %s717
      %s721 = smul.addr %s720, 4
      %s722 = scalar_lea.vmem %s0, %s721
      %p723 = scmp.lt.s32.totalorder %s30, 5
      %s724 = scalar_select %p723, %s30, 5
      %p725 = scmp.lt.s32.totalorder %s31, 0
      %s726 = scalar_select %p725, %s31, 0
      %s727 = smul.addr %s724, 2
      %s728 = sadd.s32 %s726, %s727
      %s729 = smul.addr %s728, 8
      %s730 = scalar_lea.vmem %s1, %s729
      %p731 = scmp.lt.s32.totalorder %s30, 5
      %s732 = scalar_select %p731, %s30, 5
      %s733 = smul.addr %s732, 4
      %s734 = smul.addr %s733, 8
      %s735 = scalar_lea.vmem %s2, %s734
      %p736 = scmp.lt.s32.totalorder %s30, 5
      %s737 = scalar_select %p736, %s30, 5
      %s738 = smul.addr %s737, 4
      %s739 = smul.addr %s738, 8
      %s740 = scalar_lea.vmem %s3, %s739
      %p741 = scmp.lt.s32.totalorder %s30, 5
      %s742 = scalar_select %p741, %s30, 5
      %s743 = smul.addr %s742, 4
      %s744 = smul.addr %s743, 8
      %s745 = scalar_lea.vmem %s4, %s744
      %p746 = scmp.lt.s32.totalorder %s30, 5
      %s747 = scalar_select %p746, %s30, 5
      %s748 = smul.addr %s747, 3
      %s749 = smul.addr %s748, 8
      %s750 = scalar_lea.vmem %s5, %s749
      %p751 = scmp.lt.s32.totalorder %s30, 5
      %s752 = scalar_select %p751, %s30, 5
      %s753 = smul.addr %s752, 3
      %s754 = smul.addr %s753, 8
      %s755 = scalar_lea.vmem %s6, %s754
      %p756 = scmp.lt.s32.totalorder %s30, 5
      %s757 = scalar_select %p756, %s30, 5
      %s758 = smul.addr %s757, 4
      %s759 = smul.addr %s758, 8
      %s760 = scalar_lea.vmem %s7, %s759
      %p761 = scmp.lt.s32.totalorder %s30, 5
      %s762 = scalar_select %p761, %s30, 5
      %s763 = smul.addr %s762, 4
      %s764 = smul.addr %s763, 8
      %s765 = scalar_lea.vmem %s8, %s764
      %p766 = scmp.lt.s32.totalorder %s30, 5
      %s767 = scalar_select %p766, %s30, 5
      %s768 = smul.addr %s767, 4
      %s769 = smul.addr %s768, 8
      %s770 = scalar_lea.vmem %s9, %s769
      %p771 = scmp.lt.s32.totalorder %s30, 5
      %s772 = scalar_select %p771, %s30, 5
      %s773 = smul.addr %s772, 4
      %s774 = smul.addr %s773, 8
      %s775 = scalar_lea.vmem %s10, %s774
      %p776 = scmp.lt.s32.totalorder %s30, 5
      %s777 = scalar_select %p776, %s30, 5
      %s778 = smul.addr %s777, 4
      %s779 = smul.addr %s778, 8
      %s780 = scalar_lea.vmem %s11, %s779
      %p781 = scmp.lt.s32.totalorder %s30, 5
      %s782 = scalar_select %p781, %s30, 5
      %s783 = smul.addr %s782, 4
      %s784 = smul.addr %s783, 8
      %s785 = scalar_lea.vmem %s12, %s784
      %p786 = scmp.lt.s32.totalorder %s30, 5
      %s787 = scalar_select %p786, %s30, 5
      %s788 = scalar_lea.vmem %s13, %s787
      %p789 = scmp.lt.s32.totalorder %s30, 5
      %s790 = scalar_select %p789, %s30, 5
      %s791 = scalar_lea.vmem %s14, %s790
      %p792 = scmp.lt.s32.totalorder %s30, 5
      %s793 = scalar_select %p792, %s30, 5
      %p794 = scmp.lt.s32.totalorder %s31, 0
      %s795 = scalar_select %p794, %s31, 0
      %s796 = sadd.s32 %s795, %s793
      %s797 = scalar_lea.vmem %s15, %s796
      %v798 = vld [vmem:[%s722] sm:$0x7]
      %v799 = vld [vmem:[%s730] sm:$0xff]
      %v800 = vld [vmem:[%s730 + $0x8] sm:$0xf]
      %v801 = vld [vmem:[%s735] sm:$0xff]
      %v802 = vld [vmem:[%s735 + $0x8] sm:$0xff]
      %v803 = vld [vmem:[%s735 + $0x10] sm:$0xff]
      %v804 = vld [vmem:[%s735 + $0x18] sm:$0xff]
      %v805 = vld [vmem:[%s740] sm:$0xff]
      %v806 = vld [vmem:[%s740 + $0x8] sm:$0xff]
      %v807 = vld [vmem:[%s740 + $0x10] sm:$0xff]
      %v808 = vld [vmem:[%s740 + $0x18] sm:$0xff]
      %v809 = vld [vmem:[%s745] sm:$0xff]
      %v810 = vld [vmem:[%s745 + $0x8] sm:$0xff]
      %v811 = vld [vmem:[%s745 + $0x10] sm:$0xff]
      %v812 = vld [vmem:[%s745 + $0x18] sm:$0xff]
      %vm813 = vcmask 97280
      %v815 = vsel %vm813, %v805, 0
      %v818 = vsel %vm813, %v806, 0
      %v821 = vsel %vm813, %v807, 0
      %v824 = vsel %vm813, %v808, 0
      %vm826 = vcmask 1043456
      %v828 = vsel %vm826, %v800, 0
      %830 = vmatprep.subr.mxu0 0.0
      %831 = vmatpush1.msra.mxu0 %v799
      %832 = vmatprep.subr.mxu0 0.0
      %833 = vmatpush1.msra.mxu0 %v828
      %834 = vmatprep.subr.mxu0 0.0
      %835 = vmatpush1.msra.mxu0 0.0
      %836 = vmatprep.subr.mxu0 0.0
      %837 = vmatpush1.msra.mxu0 0.0
      %838 = vmatprep.subr.mxu0 0.0
      %839 = vmatpush1.msra.mxu0 0.0
      %840 = vmatprep.subr.mxu0 0.0
      %841 = vmatpush1.msra.mxu0 0.0
      %842 = vmatprep.subr.mxu0 0.0
      %843 = vmatpush1.msra.mxu0 0.0
      %844 = vmatprep.subr.mxu0 0.0
      %845 = vmatpush1.msra.mxu0 0.0
      %846 = vmatprep.subr.mxu0 0.0
      %847 = vmatpush1.msra.mxu0 0.0
      %848 = vmatprep.subr.mxu0 0.0
      %849 = vmatpush1.msra.mxu0 0.0
      %850 = vmatprep.subr.mxu0 0.0
      %851 = vmatpush1.msra.mxu0 0.0
      %852 = vmatprep.subr.mxu0 0.0
      %853 = vmatpush1.msra.mxu0 0.0
      %854 = vmatprep.subr.mxu0 0.0
      %855 = vmatpush1.msra.mxu0 0.0
      %856 = vmatprep.subr.mxu0 0.0
      %857 = vmatpush1.msra.mxu0 0.0
      %858 = vmatprep.subr.mxu0 0.0
      %859 = vmatpush1.msra.mxu0 0.0
      %860 = vmatprep.subr.mxu0 0.0
      %861 = vmatpush1.msra.mxu0 0.0
      %862 = vmatprep.subr.mxu0 0.0
      %863 = vmatpush1.msra.mxu0 0.0
      %864 = vmatprep.subr.mxu0 0.0
      %865 = vmatpush1.msra.mxu0 0.0
      %866 = vmatprep.subr.mxu0 0.0
      %867 = vmatpush1.msra.mxu0 0.0
      %868 = vmatprep.subr.mxu0 0.0
      %869 = vmatpush1.msra.mxu0 0.0
      %870 = vmatprep.subr.mxu0 0.0
      %871 = vmatpush1.msra.mxu0 0.0
      %872 = vmatprep.subr.mxu0 0.0
      %873 = vmatpush1.msra.mxu0 0.0
      %874 = vmatprep.subr.mxu0 0.0
      %875 = vmatpush1.msra.mxu0 0.0
      %876 = vmatprep.subr.mxu0 0.0
      %877 = vmatpush1.msra.mxu0 0.0
      %878 = vmatprep.subr.mxu0 0.0
      %879 = vmatpush1.msra.mxu0 0.0
      %880 = vmatprep.subr.mxu0 0.0
      %881 = vmatpush1.msra.mxu0 0.0
      %882 = vmatprep.subr.mxu0 0.0
      %883 = vmatpush1.msra.mxu0 0.0
      %884 = vmatprep.subr.mxu0 0.0
      %885 = vmatpush1.msra.mxu0 0.0
      %886 = vmatprep.subr.mxu0 0.0
      %887 = vmatpush1.msra.mxu0 0.0
      %888 = vmatprep.subr.mxu0 0.0
      %889 = vmatpush1.msra.mxu0 0.0
      %890 = vmatprep.subr.mxu0 0.0
      %891 = vmatpush1.msra.mxu0 0.0
      %892 = vmatprep.subr.mxu0 0.0
      %893 = vmatpush1.msra.mxu0 0.0
      %894 = vmatprep.mubr.f32.mxu0 0.0
      %895 = vmatmul.mubr.f32.gmra.mrb[0].mxu0 %v815
      %v896 = vpop.f32.mrb[0].mxu0
      %v897 = vadd.f32 0.0, %v896
      %v898 = vpop.f32.mrb[0].mxu0
      %899 = vmatprep.mubr.f32.mxu0 0.0
      %900 = vmatmul.mubr.f32.gmra.mrb[0].mxu0 %v818
      %v901 = vpop.f32.mrb[0].mxu0
      %v902 = vadd.f32 0.0, %v901
      %v903 = vpop.f32.mrb[0].mxu0
      %904 = vmatprep.mubr.f32.mxu0 0.0
      %905 = vmatmul.mubr.f32.gmra.mrb[0].mxu0 %v821
      %v906 = vpop.f32.mrb[0].mxu0
      %v907 = vadd.f32 0.0, %v906
      %v908 = vpop.f32.mrb[0].mxu0
      %909 = vmatprep.mubr.f32.mxu0 0.0
      %910 = vmatmul.mubr.f32.gmra.mrb[0].mxu0 %v824
      %v911 = vpop.f32.mrb[0].mxu0
      %v912 = vadd.f32 0.0, %v911
      %v913 = vpop.f32.mrb[0].mxu0
      %914 = vdwg.mxu0
      %vm915 = vcmask 23552
      %v917 = vsel %vm915, %v801, 0
      %v920 = vsel %vm915, %v802, 0
      %v923 = vsel %vm915, %v803, 0
      %v926 = vsel %vm915, %v804, 0
      %vm928 = vcmask 1042432
      %v930 = vsel %vm928, %v798, 0
      %932 = vmatprep.subr.mxu0 0.0
      %933 = vmatpush1.msra.mxu0 %v930
      %934 = vmatprep.subr.mxu0 0.0
      %935 = vmatpush1.msra.mxu0 0.0
      %936 = vmatprep.subr.mxu0 0.0
      %937 = vmatpush1.msra.mxu0 0.0
      %938 = vmatprep.subr.mxu0 0.0
      %939 = vmatpush1.msra.mxu0 0.0
      %940 = vmatprep.subr.mxu0 0.0
      %941 = vmatpush1.msra.mxu0 0.0
      %942 = vmatprep.subr.mxu0 0.0
      %943 = vmatpush1.msra.mxu0 0.0
      %944 = vmatprep.subr.mxu0 0.0
      %945 = vmatpush1.msra.mxu0 0.0
      %946 = vmatprep.subr.mxu0 0.0
      %947 = vmatpush1.msra.mxu0 0.0
      %948 = vmatprep.subr.mxu0 0.0
      %949 = vmatpush1.msra.mxu0 0.0
      %950 = vmatprep.subr.mxu0 0.0
      %951 = vmatpush1.msra.mxu0 0.0
      %952 = vmatprep.subr.mxu0 0.0
      %953 = vmatpush1.msra.mxu0 0.0
      %954 = vmatprep.subr.mxu0 0.0
      %955 = vmatpush1.msra.mxu0 0.0
      %956 = vmatprep.subr.mxu0 0.0
      %957 = vmatpush1.msra.mxu0 0.0
      %958 = vmatprep.subr.mxu0 0.0
      %959 = vmatpush1.msra.mxu0 0.0
      %960 = vmatprep.subr.mxu0 0.0
      %961 = vmatpush1.msra.mxu0 0.0
      %962 = vmatprep.subr.mxu0 0.0
      %963 = vmatpush1.msra.mxu0 0.0
      %964 = vmatprep.subr.mxu0 0.0
      %965 = vmatpush1.msra.mxu0 0.0
      %966 = vmatprep.subr.mxu0 0.0
      %967 = vmatpush1.msra.mxu0 0.0
      %968 = vmatprep.subr.mxu0 0.0
      %969 = vmatpush1.msra.mxu0 0.0
      %970 = vmatprep.subr.mxu0 0.0
      %971 = vmatpush1.msra.mxu0 0.0
      %972 = vmatprep.subr.mxu0 0.0
      %973 = vmatpush1.msra.mxu0 0.0
      %974 = vmatprep.subr.mxu0 0.0
      %975 = vmatpush1.msra.mxu0 0.0
      %976 = vmatprep.subr.mxu0 0.0
      %977 = vmatpush1.msra.mxu0 0.0
      %978 = vmatprep.subr.mxu0 0.0
      %979 = vmatpush1.msra.mxu0 0.0
      %980 = vmatprep.subr.mxu0 0.0
      %981 = vmatpush1.msra.mxu0 0.0
      %982 = vmatprep.subr.mxu0 0.0
      %983 = vmatpush1.msra.mxu0 0.0
      %984 = vmatprep.subr.mxu0 0.0
      %985 = vmatpush1.msra.mxu0 0.0
      %986 = vmatprep.subr.mxu0 0.0
      %987 = vmatpush1.msra.mxu0 0.0
      %988 = vmatprep.subr.mxu0 0.0
      %989 = vmatpush1.msra.mxu0 0.0
      %990 = vmatprep.subr.mxu0 0.0
      %991 = vmatpush1.msra.mxu0 0.0
      %992 = vmatprep.subr.mxu0 0.0
      %993 = vmatpush1.msra.mxu0 0.0
      %994 = vmatprep.subr.mxu0 0.0
      %995 = vmatpush1.msra.mxu0 0.0
      %996 = vmatprep.mubr.f32.mxu0 0.0
      %997 = vmatmul.mubr.f32.gmra.mrb[0].mxu0 %v917
      %v998 = vpop.f32.mrb[0].mxu0
      %v999 = vadd.f32 %v897, %v998
      %v1000 = vpop.f32.mrb[0].mxu0
      %1001 = vmatprep.mubr.f32.mxu0 0.0
      %1002 = vmatmul.mubr.f32.gmra.mrb[0].mxu0 %v920
      %v1003 = vpop.f32.mrb[0].mxu0
      %v1004 = vadd.f32 %v902, %v1003
      %v1005 = vpop.f32.mrb[0].mxu0
      %1006 = vmatprep.mubr.f32.mxu0 0.0
      %1007 = vmatmul.mubr.f32.gmra.mrb[0].mxu0 %v923
      %v1008 = vpop.f32.mrb[0].mxu0
      %v1009 = vadd.f32 %v907, %v1008
      %v1010 = vpop.f32.mrb[0].mxu0
      %1011 = vmatprep.mubr.f32.mxu0 0.0
      %1012 = vmatmul.mubr.f32.gmra.mrb[0].mxu0 %v926
      %v1013 = vpop.f32.mrb[0].mxu0
      %v1014 = vadd.f32 %v912, %v1013
      %v1015 = vpop.f32.mrb[0].mxu0
      %1016 = vdwg.mxu0
      %1018 = vset.pattern.permute.xlu0 0
      %1019 = vperm.xlu0 %1018, %v809
      %v1020 = vpop.permute.xlu0 %1019
      %1023 = vset.pattern.permute.xlu0 0
      %1024 = vperm.xlu0 %1023, %v810
      %v1025 = vpop.permute.xlu0 %1024
      %1028 = vset.pattern.permute.xlu0 0
      %1029 = vperm.xlu0 %1028, %v811
      %v1030 = vpop.permute.xlu0 %1029
      %1033 = vset.pattern.permute.xlu0 0
      %1034 = vperm.xlu0 %1033, %v812
      %v1035 = vpop.permute.xlu0 %1034
      %v1037 = vadd.f32 %v999, %v1020
      %v1038 = vadd.f32 %v1004, %v1025
      %v1039 = vadd.f32 %v1009, %v1030
      %v1040 = vadd.f32 %v1014, %v1035
      %v1041 = vmul.f32 %v1037, 100.0
      %v1042 = vmul.f32 %v1038, 100.0
      %v1043 = vmul.f32 %v1039, 100.0
      %v1044 = vmul.f32 %v1040, 100.0
      %v1045 = vmin.f32 %v1041, 20.0
      %v1046 = vmin.f32 %v1042, 20.0
      %v1047 = vmin.f32 %v1043, 20.0
      %v1048 = vmin.f32 %v1044, 20.0
      %v1049 = vmul.f32 %v1045, 1.442695
      %v1050 = vpow.pop %v1049
      %v1051 = vmul.f32 %v1046, 1.442695
      %v1052 = vpow.pop %v1051
      %v1053 = vmul.f32 %v1047, 1.442695
      %v1054 = vpow.pop %v1053
      %v1055 = vmul.f32 %v1048, 1.442695
      %v1056 = vpow.pop %v1055
      %v1057 = vadd.f32 %v1050, 1.0
      %v1058 = vlog2.pop %v1057
      %v1059 = vmul.f32 %v1058, 0.6931472
      %v1060 = vmul.f32 -0.5, %v1050
      %v1061 = vadd.f32 %v1060, 1.0
      %v1062 = vmul.f32 %v1061, %v1050
      %v1063 = vand.u32 2147483647, %v1050
      %vm1064 = vcmp.lt.f32.partialorder %v1063, 0.0004427343
      %v1065 = vsel %vm1064, %v1062, %v1059
      %v1066 = vadd.f32 %v1052, 1.0
      %v1067 = vlog2.pop %v1066
      %v1068 = vmul.f32 %v1067, 0.6931472
      %v1069 = vmul.f32 -0.5, %v1052
      %v1070 = vadd.f32 %v1069, 1.0
      %v1071 = vmul.f32 %v1070, %v1052
      %v1072 = vand.u32 2147483647, %v1052
      %vm1073 = vcmp.lt.f32.partialorder %v1072, 0.0004427343
      %v1074 = vsel %vm1073, %v1071, %v1068
      %v1075 = vadd.f32 %v1054, 1.0
      %v1076 = vlog2.pop %v1075
      %v1077 = vmul.f32 %v1076, 0.6931472
      %v1078 = vmul.f32 -0.5, %v1054
      %v1079 = vadd.f32 %v1078, 1.0
      %v1080 = vmul.f32 %v1079, %v1054
      %v1081 = vand.u32 2147483647, %v1054
      %vm1082 = vcmp.lt.f32.partialorder %v1081, 0.0004427343
      %v1083 = vsel %vm1082, %v1080, %v1077
      %v1084 = vadd.f32 %v1056, 1.0
      %v1085 = vlog2.pop %v1084
      %v1086 = vmul.f32 %v1085, 0.6931472
      %v1087 = vmul.f32 -0.5, %v1056
      %v1088 = vadd.f32 %v1087, 1.0
      %v1089 = vmul.f32 %v1088, %v1056
      %v1090 = vand.u32 2147483647, %v1056
      %vm1091 = vcmp.lt.f32.partialorder %v1090, 0.0004427343
      %v1092 = vsel %vm1091, %v1089, %v1086
      %v1093 = vrcp.pop 100.0
      %v1094 = vmul.f32 %v1065, %v1093
      %v1095 = vmul.f32 %v1074, %v1093
      %v1096 = vmul.f32 %v1083, %v1093
      %v1097 = vmul.f32 %v1092, %v1093
      %vm1098 = vcmp.gt.f32.partialorder %v1041, 20.0
      %vm1099 = vcmp.gt.f32.partialorder %v1042, 20.0
      %vm1100 = vcmp.gt.f32.partialorder %v1043, 20.0
      %vm1101 = vcmp.gt.f32.partialorder %v1044, 20.0
      %v1102 = vsel %vm1098, %v1037, %v1094
      %v1103 = vsel %vm1099, %v1038, %v1095
      %v1104 = vsel %vm1100, %v1039, %v1096
      %v1105 = vsel %vm1101, %v1040, %v1097
      %v1106 = vld [vmem:[%s750] sm:$0xff]
      %v1107 = vld [vmem:[%s750 + $0x8] sm:$0xff]
      %v1108 = vld [vmem:[%s750 + $0x10] sm:$0x1]
      %v1109 = vld [vmem:[%s755] sm:$0xff]
      %v1110 = vld [vmem:[%s755 + $0x8] sm:$0xff]
      %v1111 = vld [vmem:[%s755 + $0x10] sm:$0x1]
      %1113 = vset.pattern.permute.xlu0 0
      %1114 = vperm.xlu0 %1113, %v1109
      %v1115 = vpop.permute.xlu0 %1114
      %1118 = vset.pattern.permute.xlu0 0
      %1119 = vperm.xlu0 %1118, %v1110
      %v1120 = vpop.permute.xlu0 %1119
      %1123 = vset.pattern.permute.xlu0 0
      %1124 = vperm.xlu0 %1123, %v1111
      %v1125 = vpop.permute.xlu0 %1124
      %vm1127 = vcmask 261120
      %v1129 = vsel %vm1127, %v1106, 0
      %v1132 = vsel %vm1127, %v1107, 0
      %v1135 = vsel %vm1127, %v1108, 0
      %1137 = vmatprep.subr.mxu0 0.0
      %1138 = vmatpush1.msra.mxu0 %v1102
      %1139 = vmatprep.subr.mxu0 0.0
      %1140 = vmatpush1.msra.mxu0 %v1103
      %1141 = vmatprep.subr.mxu0 0.0
      %1142 = vmatpush1.msra.mxu0 %v1104
      %1143 = vmatprep.subr.mxu0 0.0
      %1144 = vmatpush1.msra.mxu0 %v1105
      %1145 = vmatprep.subr.mxu0 0.0
      %1146 = vmatpush1.msra.mxu0 0.0
      %1147 = vmatprep.subr.mxu0 0.0
      %1148 = vmatpush1.msra.mxu0 0.0
      %1149 = vmatprep.subr.mxu0 0.0
      %1150 = vmatpush1.msra.mxu0 0.0
      %1151 = vmatprep.subr.mxu0 0.0
      %1152 = vmatpush1.msra.mxu0 0.0
      %1153 = vmatprep.subr.mxu0 0.0
      %1154 = vmatpush1.msra.mxu0 0.0
      %1155 = vmatprep.subr.mxu0 0.0
      %1156 = vmatpush1.msra.mxu0 0.0
      %1157 = vmatprep.subr.mxu0 0.0
      %1158 = vmatpush1.msra.mxu0 0.0
      %1159 = vmatprep.subr.mxu0 0.0
      %1160 = vmatpush1.msra.mxu0 0.0
      %1161 = vmatprep.subr.mxu0 0.0
      %1162 = vmatpush1.msra.mxu0 0.0
      %1163 = vmatprep.subr.mxu0 0.0
      %1164 = vmatpush1.msra.mxu0 0.0
      %1165 = vmatprep.subr.mxu0 0.0
      %1166 = vmatpush1.msra.mxu0 0.0
      %1167 = vmatprep.subr.mxu0 0.0
      %1168 = vmatpush1.msra.mxu0 0.0
      %1169 = vmatprep.subr.mxu0 0.0
      %1170 = vmatpush1.msra.mxu0 0.0
      %1171 = vmatprep.subr.mxu0 0.0
      %1172 = vmatpush1.msra.mxu0 0.0
      %1173 = vmatprep.subr.mxu0 0.0
      %1174 = vmatpush1.msra.mxu0 0.0
      %1175 = vmatprep.subr.mxu0 0.0
      %1176 = vmatpush1.msra.mxu0 0.0
      %1177 = vmatprep.subr.mxu0 0.0
      %1178 = vmatpush1.msra.mxu0 0.0
      %1179 = vmatprep.subr.mxu0 0.0
      %1180 = vmatpush1.msra.mxu0 0.0
      %1181 = vmatprep.subr.mxu0 0.0
      %1182 = vmatpush1.msra.mxu0 0.0
      %1183 = vmatprep.subr.mxu0 0.0
      %1184 = vmatpush1.msra.mxu0 0.0
      %1185 = vmatprep.subr.mxu0 0.0
      %1186 = vmatpush1.msra.mxu0 0.0
      %1187 = vmatprep.subr.mxu0 0.0
      %1188 = vmatpush1.msra.mxu0 0.0
      %1189 = vmatprep.subr.mxu0 0.0
      %1190 = vmatpush1.msra.mxu0 0.0
      %1191 = vmatprep.subr.mxu0 0.0
      %1192 = vmatpush1.msra.mxu0 0.0
      %1193 = vmatprep.subr.mxu0 0.0
      %1194 = vmatpush1.msra.mxu0 0.0
      %1195 = vmatprep.subr.mxu0 0.0
      %1196 = vmatpush1.msra.mxu0 0.0
      %1197 = vmatprep.subr.mxu0 0.0
      %1198 = vmatpush1.msra.mxu0 0.0
      %1199 = vmatprep.subr.mxu0 0.0
      %1200 = vmatpush1.msra.mxu0 0.0
      %1201 = vmatprep.mubr.f32.mxu0 0.0
      %1202 = vmatmul.mubr.f32.gmra.mrb[0].mxu0 %v1129
      %v1203 = vpop.f32.mrb[0].mxu0
      %v1204 = vadd.f32 %v1115, %v1203
      %v1205 = vpop.f32.mrb[0].mxu0
      %1206 = vmatprep.mubr.f32.mxu0 0.0
      %1207 = vmatmul.mubr.f32.gmra.mrb[0].mxu0 %v1132
      %v1208 = vpop.f32.mrb[0].mxu0
      %v1209 = vadd.f32 %v1120, %v1208
      %v1210 = vpop.f32.mrb[0].mxu0
      %1211 = vmatprep.mubr.f32.mxu0 0.0
      %1212 = vmatmul.mubr.f32.gmra.mrb[0].mxu0 %v1135
      %v1213 = vpop.f32.mrb[0].mxu0
      %v1214 = vadd.f32 %v1125, %v1213
      %v1215 = vpop.f32.mrb[0].mxu0
      %1216 = vdwg.mxu0
      %v1217 = vmul.f32 %v1204, 100.0
      %v1218 = vmul.f32 %v1209, 100.0
      %v1219 = vmul.f32 %v1214, 100.0
      %v1220 = vmin.f32 %v1217, 20.0
      %v1221 = vmin.f32 %v1218, 20.0
      %v1222 = vmin.f32 %v1219, 20.0
      %v1223 = vmul.f32 %v1220, 1.442695
      %v1224 = vpow.pop %v1223
      %v1225 = vmul.f32 %v1221, 1.442695
      %v1226 = vpow.pop %v1225
      %v1227 = vmul.f32 %v1222, 1.442695
      %v1228 = vpow.pop %v1227
      %v1229 = vadd.f32 %v1224, 1.0
      %v1230 = vlog2.pop %v1229
      %v1231 = vmul.f32 %v1230, 0.6931472
      %v1232 = vmul.f32 -0.5, %v1224
      %v1233 = vadd.f32 %v1232, 1.0
      %v1234 = vmul.f32 %v1233, %v1224
      %v1235 = vand.u32 2147483647, %v1224
      %vm1236 = vcmp.lt.f32.partialorder %v1235, 0.0004427343
      %v1237 = vsel %vm1236, %v1234, %v1231
      %v1238 = vadd.f32 %v1226, 1.0
      %v1239 = vlog2.pop %v1238
      %v1240 = vmul.f32 %v1239, 0.6931472
      %v1241 = vmul.f32 -0.5, %v1226
      %v1242 = vadd.f32 %v1241, 1.0
      %v1243 = vmul.f32 %v1242, %v1226
      %v1244 = vand.u32 2147483647, %v1226
      %vm1245 = vcmp.lt.f32.partialorder %v1244, 0.0004427343
      %v1246 = vsel %vm1245, %v1243, %v1240
      %v1247 = vadd.f32 %v1228, 1.0
      %v1248 = vlog2.pop %v1247
      %v1249 = vmul.f32 %v1248, 0.6931472
      %v1250 = vmul.f32 -0.5, %v1228
      %v1251 = vadd.f32 %v1250, 1.0
      %v1252 = vmul.f32 %v1251, %v1228
      %v1253 = vand.u32 2147483647, %v1228
      %vm1254 = vcmp.lt.f32.partialorder %v1253, 0.0004427343
      %v1255 = vsel %vm1254, %v1252, %v1249
      %v1256 = vmul.f32 %v1237, %v1093
      %v1257 = vmul.f32 %v1246, %v1093
      %v1258 = vmul.f32 %v1255, %v1093
      %vm1259 = vcmp.gt.f32.partialorder %v1217, 20.0
      %vm1260 = vcmp.gt.f32.partialorder %v1218, 20.0
      %vm1261 = vcmp.gt.f32.partialorder %v1219, 20.0
      %v1262 = vsel %vm1259, %v1204, %v1256
      %v1263 = vsel %vm1260, %v1209, %v1257
      %v1264 = vsel %vm1261, %v1214, %v1258
      %v1265 = vld [vmem:[%s760] sm:$0xff]
      %v1266 = vld [vmem:[%s760 + $0x8] sm:$0xff]
      %v1267 = vld [vmem:[%s760 + $0x10] sm:$0xff]
      %v1268 = vld [vmem:[%s760 + $0x18] sm:$0xff]
      %v1269 = vld [vmem:[%s765] sm:$0xff]
      %v1270 = vld [vmem:[%s765 + $0x8] sm:$0xff]
      %v1271 = vld [vmem:[%s765 + $0x10] sm:$0xff]
      %v1272 = vld [vmem:[%s765 + $0x18] sm:$0xff]
      %v1273 = vld [vmem:[%s770] sm:$0xff]
      %v1274 = vld [vmem:[%s770 + $0x8] sm:$0xff]
      %v1275 = vld [vmem:[%s770 + $0x10] sm:$0xff]
      %v1276 = vld [vmem:[%s770 + $0x18] sm:$0xff]
      %v1277 = vld [vmem:[%s775] sm:$0xff]
      %v1278 = vld [vmem:[%s775 + $0x8] sm:$0xff]
      %v1279 = vld [vmem:[%s775 + $0x10] sm:$0xff]
      %v1280 = vld [vmem:[%s775 + $0x18] sm:$0xff]
      %v1282 = vsel %vm915, %v1269, 0
      %v1285 = vsel %vm915, %v1270, 0
      %v1288 = vsel %vm915, %v1271, 0
      %v1291 = vsel %vm915, %v1272, 0
      %1293 = vmatprep.subr.mxu0 0.0
      %1294 = vmatpush1.msra.mxu0 %v930
      %1295 = vmatprep.subr.mxu0 0.0
      %1296 = vmatpush1.msra.mxu0 0.0
      %1297 = vmatprep.subr.mxu0 0.0
      %1298 = vmatpush1.msra.mxu0 0.0
      %1299 = vmatprep.subr.mxu0 0.0
      %1300 = vmatpush1.msra.mxu0 0.0
      %1301 = vmatprep.subr.mxu0 0.0
      %1302 = vmatpush1.msra.mxu0 0.0
      %1303 = vmatprep.subr.mxu0 0.0
      %1304 = vmatpush1.msra.mxu0 0.0
      %1305 = vmatprep.subr.mxu0 0.0
      %1306 = vmatpush1.msra.mxu0 0.0
      %1307 = vmatprep.subr.mxu0 0.0
      %1308 = vmatpush1.msra.mxu0 0.0
      %1309 = vmatprep.subr.mxu0 0.0
      %1310 = vmatpush1.msra.mxu0 0.0
      %1311 = vmatprep.subr.mxu0 0.0
      %1312 = vmatpush1.msra.mxu0 0.0
      %1313 = vmatprep.subr.mxu0 0.0
      %1314 = vmatpush1.msra.mxu0 0.0
      %1315 = vmatprep.subr.mxu0 0.0
      %1316 = vmatpush1.msra.mxu0 0.0
      %1317 = vmatprep.subr.mxu0 0.0
      %1318 = vmatpush1.msra.mxu0 0.0
      %1319 = vmatprep.subr.mxu0 0.0
      %1320 = vmatpush1.msra.mxu0 0.0
      %1321 = vmatprep.subr.mxu0 0.0
      %1322 = vmatpush1.msra.mxu0 0.0
      %1323 = vmatprep.subr.mxu0 0.0
      %1324 = vmatpush1.msra.mxu0 0.0
      %1325 = vmatprep.subr.mxu0 0.0
      %1326 = vmatpush1.msra.mxu0 0.0
      %1327 = vmatprep.subr.mxu0 0.0
      %1328 = vmatpush1.msra.mxu0 0.0
      %1329 = vmatprep.subr.mxu0 0.0
      %1330 = vmatpush1.msra.mxu0 0.0
      %1331 = vmatprep.subr.mxu0 0.0
      %1332 = vmatpush1.msra.mxu0 0.0
      %1333 = vmatprep.subr.mxu0 0.0
      %1334 = vmatpush1.msra.mxu0 0.0
      %1335 = vmatprep.subr.mxu0 0.0
      %1336 = vmatpush1.msra.mxu0 0.0
      %1337 = vmatprep.subr.mxu0 0.0
      %1338 = vmatpush1.msra.mxu0 0.0
      %1339 = vmatprep.subr.mxu0 0.0
      %1340 = vmatpush1.msra.mxu0 0.0
      %1341 = vmatprep.subr.mxu0 0.0
      %1342 = vmatpush1.msra.mxu0 0.0
      %1343 = vmatprep.subr.mxu0 0.0
      %1344 = vmatpush1.msra.mxu0 0.0
      %1345 = vmatprep.subr.mxu0 0.0
      %1346 = vmatpush1.msra.mxu0 0.0
      %1347 = vmatprep.subr.mxu0 0.0
      %1348 = vmatpush1.msra.mxu0 0.0
      %1349 = vmatprep.subr.mxu0 0.0
      %1350 = vmatpush1.msra.mxu0 0.0
      %1351 = vmatprep.subr.mxu0 0.0
      %1352 = vmatpush1.msra.mxu0 0.0
      %1353 = vmatprep.subr.mxu0 0.0
      %1354 = vmatpush1.msra.mxu0 0.0
      %1355 = vmatprep.subr.mxu0 0.0
      %1356 = vmatpush1.msra.mxu0 0.0
      %1357 = vmatprep.mubr.f32.mxu0 0.0
      %1358 = vmatmul.mubr.f32.gmra.mrb[0].mxu0 %v1282
      %v1359 = vpop.f32.mrb[0].mxu0
      %v1360 = vadd.f32 0.0, %v1359
      %v1361 = vpop.f32.mrb[0].mxu0
      %1362 = vmatprep.mubr.f32.mxu0 0.0
      %1363 = vmatmul.mubr.f32.gmra.mrb[0].mxu0 %v1285
      %v1364 = vpop.f32.mrb[0].mxu0
      %v1365 = vadd.f32 0.0, %v1364
      %v1366 = vpop.f32.mrb[0].mxu0
      %1367 = vmatprep.mubr.f32.mxu0 0.0
      %1368 = vmatmul.mubr.f32.gmra.mrb[0].mxu0 %v1288
      %v1369 = vpop.f32.mrb[0].mxu0
      %v1370 = vadd.f32 0.0, %v1369
      %v1371 = vpop.f32.mrb[0].mxu0
      %1372 = vmatprep.mubr.f32.mxu0 0.0
      %1373 = vmatmul.mubr.f32.gmra.mrb[0].mxu0 %v1291
      %v1374 = vpop.f32.mrb[0].mxu0
      %v1375 = vadd.f32 0.0, %v1374
      %v1376 = vpop.f32.mrb[0].mxu0
      %1377 = vdwg.mxu0
      %vm1378 = vcmask 138240
      %v1380 = vsel %vm1378, %v1265, 0
      %v1383 = vsel %vm1378, %v1266, 0
      %v1386 = vsel %vm1378, %v1267, 0
      %v1389 = vsel %vm1378, %v1268, 0
      %vm1391 = vcmask 1040384
      %v1393 = vsel %vm1391, %v1264, 0
      %1395 = vmatprep.subr.mxu0 0.0
      %1396 = vmatpush1.msra.mxu0 %v1262
      %1397 = vmatprep.subr.mxu0 0.0
      %1398 = vmatpush1.msra.mxu0 %v1263
      %1399 = vmatprep.subr.mxu0 0.0
      %1400 = vmatpush1.msra.mxu0 %v1393
      %1401 = vmatprep.subr.mxu0 0.0
      %1402 = vmatpush1.msra.mxu0 0.0
      %1403 = vmatprep.subr.mxu0 0.0
      %1404 = vmatpush1.msra.mxu0 0.0
      %1405 = vmatprep.subr.mxu0 0.0
      %1406 = vmatpush1.msra.mxu0 0.0
      %1407 = vmatprep.subr.mxu0 0.0
      %1408 = vmatpush1.msra.mxu0 0.0
      %1409 = vmatprep.subr.mxu0 0.0
      %1410 = vmatpush1.msra.mxu0 0.0
      %1411 = vmatprep.subr.mxu0 0.0
      %1412 = vmatpush1.msra.mxu0 0.0
      %1413 = vmatprep.subr.mxu0 0.0
      %1414 = vmatpush1.msra.mxu0 0.0
      %1415 = vmatprep.subr.mxu0 0.0
      %1416 = vmatpush1.msra.mxu0 0.0
      %1417 = vmatprep.subr.mxu0 0.0
      %1418 = vmatpush1.msra.mxu0 0.0
      %1419 = vmatprep.subr.mxu0 0.0
      %1420 = vmatpush1.msra.mxu0 0.0
      %1421 = vmatprep.subr.mxu0 0.0
      %1422 = vmatpush1.msra.mxu0 0.0
      %1423 = vmatprep.subr.mxu0 0.0
      %1424 = vmatpush1.msra.mxu0 0.0
      %1425 = vmatprep.subr.mxu0 0.0
      %1426 = vmatpush1.msra.mxu0 0.0
      %1427 = vmatprep.subr.mxu0 0.0
      %1428 = vmatpush1.msra.mxu0 0.0
      %1429 = vmatprep.subr.mxu0 0.0
      %1430 = vmatpush1.msra.mxu0 0.0
      %1431 = vmatprep.subr.mxu0 0.0
      %1432 = vmatpush1.msra.mxu0 0.0
      %1433 = vmatprep.subr.mxu0 0.0
      %1434 = vmatpush1.msra.mxu0 0.0
      %1435 = vmatprep.subr.mxu0 0.0
      %1436 = vmatpush1.msra.mxu0 0.0
      %1437 = vmatprep.subr.mxu0 0.0
      %1438 = vmatpush1.msra.mxu0 0.0
      %1439 = vmatprep.subr.mxu0 0.0
      %1440 = vmatpush1.msra.mxu0 0.0
      %1441 = vmatprep.subr.mxu0 0.0
      %1442 = vmatpush1.msra.mxu0 0.0
      %1443 = vmatprep.subr.mxu0 0.0
      %1444 = vmatpush1.msra.mxu0 0.0
      %1445 = vmatprep.subr.mxu0 0.0
      %1446 = vmatpush1.msra.mxu0 0.0
      %1447 = vmatprep.subr.mxu0 0.0
      %1448 = vmatpush1.msra.mxu0 0.0
      %1449 = vmatprep.subr.mxu0 0.0
      %1450 = vmatpush1.msra.mxu0 0.0
      %1451 = vmatprep.subr.mxu0 0.0
      %1452 = vmatpush1.msra.mxu0 0.0
      %1453 = vmatprep.subr.mxu0 0.0
      %1454 = vmatpush1.msra.mxu0 0.0
      %1455 = vmatprep.subr.mxu0 0.0
      %1456 = vmatpush1.msra.mxu0 0.0
      %1457 = vmatprep.subr.mxu0 0.0
      %1458 = vmatpush1.msra.mxu0 0.0
      %1459 = vmatprep.mubr.f32.mxu0 0.0
      %1460 = vmatmul.mubr.f32.gmra.mrb[0].mxu0 %v1380
      %v1461 = vpop.f32.mrb[0].mxu0
      %v1462 = vadd.f32 %v1360, %v1461
      %v1463 = vpop.f32.mrb[0].mxu0
      %1464 = vmatprep.mubr.f32.mxu0 0.0
      %1465 = vmatmul.mubr.f32.gmra.mrb[0].mxu0 %v1383
      %v1466 = vpop.f32.mrb[0].mxu0
      %v1467 = vadd.f32 %v1365, %v1466
      %v1468 = vpop.f32.mrb[0].mxu0
      %1469 = vmatprep.mubr.f32.mxu0 0.0
      %1470 = vmatmul.mubr.f32.gmra.mrb[0].mxu0 %v1386
      %v1471 = vpop.f32.mrb[0].mxu0
      %v1472 = vadd.f32 %v1370, %v1471
      %v1473 = vpop.f32.mrb[0].mxu0
      %1474 = vmatprep.mubr.f32.mxu0 0.0
      %1475 = vmatmul.mubr.f32.gmra.mrb[0].mxu0 %v1389
      %v1476 = vpop.f32.mrb[0].mxu0
      %v1477 = vadd.f32 %v1375, %v1476
      %v1478 = vpop.f32.mrb[0].mxu0
      %1479 = vdwg.mxu0
      %v1481 = vsel %vm813, %v1273, 0
      %v1484 = vsel %vm813, %v1274, 0
      %v1487 = vsel %vm813, %v1275, 0
      %v1490 = vsel %vm813, %v1276, 0
      %1492 = vmatprep.subr.mxu0 0.0
      %1493 = vmatpush1.msra.mxu0 %v799
      %1494 = vmatprep.subr.mxu0 0.0
      %1495 = vmatpush1.msra.mxu0 %v828
      %1496 = vmatprep.subr.mxu0 0.0
      %1497 = vmatpush1.msra.mxu0 0.0
      %1498 = vmatprep.subr.mxu0 0.0
      %1499 = vmatpush1.msra.mxu0 0.0
      %1500 = vmatprep.subr.mxu0 0.0
      %1501 = vmatpush1.msra.mxu0 0.0
      %1502 = vmatprep.subr.mxu0 0.0
      %1503 = vmatpush1.msra.mxu0 0.0
      %1504 = vmatprep.subr.mxu0 0.0
      %1505 = vmatpush1.msra.mxu0 0.0
      %1506 = vmatprep.subr.mxu0 0.0
      %1507 = vmatpush1.msra.mxu0 0.0
      %1508 = vmatprep.subr.mxu0 0.0
      %1509 = vmatpush1.msra.mxu0 0.0
      %1510 = vmatprep.subr.mxu0 0.0
      %1511 = vmatpush1.msra.mxu0 0.0
      %1512 = vmatprep.subr.mxu0 0.0
      %1513 = vmatpush1.msra.mxu0 0.0
      %1514 = vmatprep.subr.mxu0 0.0
      %1515 = vmatpush1.msra.mxu0 0.0
      %1516 = vmatprep.subr.mxu0 0.0
      %1517 = vmatpush1.msra.mxu0 0.0
      %1518 = vmatprep.subr.mxu0 0.0
      %1519 = vmatpush1.msra.mxu0 0.0
      %1520 = vmatprep.subr.mxu0 0.0
      %1521 = vmatpush1.msra.mxu0 0.0
      %1522 = vmatprep.subr.mxu0 0.0
      %1523 = vmatpush1.msra.mxu0 0.0
      %1524 = vmatprep.subr.mxu0 0.0
      %1525 = vmatpush1.msra.mxu0 0.0
      %1526 = vmatprep.subr.mxu0 0.0
      %1527 = vmatpush1.msra.mxu0 0.0
      %1528 = vmatprep.subr.mxu0 0.0
      %1529 = vmatpush1.msra.mxu0 0.0
      %1530 = vmatprep.subr.mxu0 0.0
      %1531 = vmatpush1.msra.mxu0 0.0
      %1532 = vmatprep.subr.mxu0 0.0
      %1533 = vmatpush1.msra.mxu0 0.0
      %1534 = vmatprep.subr.mxu0 0.0
      %1535 = vmatpush1.msra.mxu0 0.0
      %1536 = vmatprep.subr.mxu0 0.0
      %1537 = vmatpush1.msra.mxu0 0.0
      %1538 = vmatprep.subr.mxu0 0.0
      %1539 = vmatpush1.msra.mxu0 0.0
      %1540 = vmatprep.subr.mxu0 0.0
      %1541 = vmatpush1.msra.mxu0 0.0
      %1542 = vmatprep.subr.mxu0 0.0
      %1543 = vmatpush1.msra.mxu0 0.0
      %1544 = vmatprep.subr.mxu0 0.0
      %1545 = vmatpush1.msra.mxu0 0.0
      %1546 = vmatprep.subr.mxu0 0.0
      %1547 = vmatpush1.msra.mxu0 0.0
      %1548 = vmatprep.subr.mxu0 0.0
      %1549 = vmatpush1.msra.mxu0 0.0
      %1550 = vmatprep.subr.mxu0 0.0
      %1551 = vmatpush1.msra.mxu0 0.0
      %1552 = vmatprep.subr.mxu0 0.0
      %1553 = vmatpush1.msra.mxu0 0.0
      %1554 = vmatprep.subr.mxu0 0.0
      %1555 = vmatpush1.msra.mxu0 0.0
      %1556 = vmatprep.mubr.f32.mxu0 0.0
      %1557 = vmatmul.mubr.f32.gmra.mrb[0].mxu0 %v1481
      %v1558 = vpop.f32.mrb[0].mxu0
      %v1559 = vadd.f32 0.0, %v1558
      %v1560 = vpop.f32.mrb[0].mxu0
      %1561 = vmatprep.mubr.f32.mxu0 0.0
      %1562 = vmatmul.mubr.f32.gmra.mrb[0].mxu0 %v1484
      %v1563 = vpop.f32.mrb[0].mxu0
      %v1564 = vadd.f32 0.0, %v1563
      %v1565 = vpop.f32.mrb[0].mxu0
      %1566 = vmatprep.mubr.f32.mxu0 0.0
      %1567 = vmatmul.mubr.f32.gmra.mrb[0].mxu0 %v1487
      %v1568 = vpop.f32.mrb[0].mxu0
      %v1569 = vadd.f32 0.0, %v1568
      %v1570 = vpop.f32.mrb[0].mxu0
      %1571 = vmatprep.mubr.f32.mxu0 0.0
      %1572 = vmatmul.mubr.f32.gmra.mrb[0].mxu0 %v1490
      %v1573 = vpop.f32.mrb[0].mxu0
      %v1574 = vadd.f32 0.0, %v1573
      %v1575 = vpop.f32.mrb[0].mxu0
      %1576 = vdwg.mxu0
      %v1577 = vadd.f32 %v1462, %v1559
      %v1578 = vadd.f32 %v1467, %v1564
      %v1579 = vadd.f32 %v1472, %v1569
      %v1580 = vadd.f32 %v1477, %v1574
      %1582 = vset.pattern.permute.xlu0 0
      %1583 = vperm.xlu0 %1582, %v1277
      %v1584 = vpop.permute.xlu0 %1583
      %1587 = vset.pattern.permute.xlu0 0
      %1588 = vperm.xlu0 %1587, %v1278
      %v1589 = vpop.permute.xlu0 %1588
      %1592 = vset.pattern.permute.xlu0 0
      %1593 = vperm.xlu0 %1592, %v1279
      %v1594 = vpop.permute.xlu0 %1593
      %1597 = vset.pattern.permute.xlu0 0
      %1598 = vperm.xlu0 %1597, %v1280
      %v1599 = vpop.permute.xlu0 %1598
      %v1601 = vadd.f32 %v1577, %v1584
      %v1602 = vadd.f32 %v1578, %v1589
      %v1603 = vadd.f32 %v1579, %v1594
      %v1604 = vadd.f32 %v1580, %v1599
      %v1605 = vmul.f32 %v1601, 100.0
      %v1606 = vmul.f32 %v1602, 100.0
      %v1607 = vmul.f32 %v1603, 100.0
      %v1608 = vmul.f32 %v1604, 100.0
      %v1609 = vmin.f32 %v1605, 20.0
      %v1610 = vmin.f32 %v1606, 20.0
      %v1611 = vmin.f32 %v1607, 20.0
      %v1612 = vmin.f32 %v1608, 20.0
      %v1613 = vmul.f32 %v1609, 1.442695
      %v1614 = vpow.pop %v1613
      %v1615 = vmul.f32 %v1610, 1.442695
      %v1616 = vpow.pop %v1615
      %v1617 = vmul.f32 %v1611, 1.442695
      %v1618 = vpow.pop %v1617
      %v1619 = vmul.f32 %v1612, 1.442695
      %v1620 = vpow.pop %v1619
      %v1621 = vadd.f32 %v1614, 1.0
      %v1622 = vlog2.pop %v1621
      %v1623 = vmul.f32 %v1622, 0.6931472
      %v1624 = vmul.f32 -0.5, %v1614
      %v1625 = vadd.f32 %v1624, 1.0
      %v1626 = vmul.f32 %v1625, %v1614
      %v1627 = vand.u32 2147483647, %v1614
      %vm1628 = vcmp.lt.f32.partialorder %v1627, 0.0004427343
      %v1629 = vsel %vm1628, %v1626, %v1623
      %v1630 = vadd.f32 %v1616, 1.0
      %v1631 = vlog2.pop %v1630
      %v1632 = vmul.f32 %v1631, 0.6931472
      %v1633 = vmul.f32 -0.5, %v1616
      %v1634 = vadd.f32 %v1633, 1.0
      %v1635 = vmul.f32 %v1634, %v1616
      %v1636 = vand.u32 2147483647, %v1616
      %vm1637 = vcmp.lt.f32.partialorder %v1636, 0.0004427343
      %v1638 = vsel %vm1637, %v1635, %v1632
      %v1639 = vadd.f32 %v1618, 1.0
      %v1640 = vlog2.pop %v1639
      %v1641 = vmul.f32 %v1640, 0.6931472
      %v1642 = vmul.f32 -0.5, %v1618
      %v1643 = vadd.f32 %v1642, 1.0
      %v1644 = vmul.f32 %v1643, %v1618
      %v1645 = vand.u32 2147483647, %v1618
      %vm1646 = vcmp.lt.f32.partialorder %v1645, 0.0004427343
      %v1647 = vsel %vm1646, %v1644, %v1641
      %v1648 = vadd.f32 %v1620, 1.0
      %v1649 = vlog2.pop %v1648
      %v1650 = vmul.f32 %v1649, 0.6931472
      %v1651 = vmul.f32 -0.5, %v1620
      %v1652 = vadd.f32 %v1651, 1.0
      %v1653 = vmul.f32 %v1652, %v1620
      %v1654 = vand.u32 2147483647, %v1620
      %vm1655 = vcmp.lt.f32.partialorder %v1654, 0.0004427343
      %v1656 = vsel %vm1655, %v1653, %v1650
      %v1657 = vmul.f32 %v1629, %v1093
      %v1658 = vmul.f32 %v1638, %v1093
      %v1659 = vmul.f32 %v1647, %v1093
      %v1660 = vmul.f32 %v1656, %v1093
      %vm1661 = vcmp.gt.f32.partialorder %v1605, 20.0
      %vm1662 = vcmp.gt.f32.partialorder %v1606, 20.0
      %vm1663 = vcmp.gt.f32.partialorder %v1607, 20.0
      %vm1664 = vcmp.gt.f32.partialorder %v1608, 20.0
      %v1665 = vsel %vm1661, %v1601, %v1657
      %v1666 = vsel %vm1662, %v1602, %v1658
      %v1667 = vsel %vm1663, %v1603, %v1659
      %v1668 = vsel %vm1664, %v1604, %v1660
      %v1669 = vld [vmem:[%s780] sm:$0xff]
      %v1670 = vld [vmem:[%s780 + $0x8] sm:$0xff]
      %v1671 = vld [vmem:[%s780 + $0x10] sm:$0xff]
      %v1672 = vld [vmem:[%s780 + $0x18] sm:$0xff]
      %v1673 = vld [vmem:[%s785] sm:$0xff]
      %v1674 = vld [vmem:[%s785 + $0x8] sm:$0xff]
      %v1675 = vld [vmem:[%s785 + $0x10] sm:$0xff]
      %v1676 = vld [vmem:[%s785 + $0x18] sm:$0xff]
      %1678 = vset.pattern.permute.xlu0 0
      %1679 = vperm.xlu0 %1678, %v1673
      %v1680 = vpop.permute.xlu0 %1679
      %1683 = vset.pattern.permute.xlu0 0
      %1684 = vperm.xlu0 %1683, %v1674
      %v1685 = vpop.permute.xlu0 %1684
      %1688 = vset.pattern.permute.xlu0 0
      %1689 = vperm.xlu0 %1688, %v1675
      %v1690 = vpop.permute.xlu0 %1689
      %1693 = vset.pattern.permute.xlu0 0
      %1694 = vperm.xlu0 %1693, %v1676
      %v1695 = vpop.permute.xlu0 %1694
      %v1698 = vsel %vm1127, %v1669, 0
      %v1701 = vsel %vm1127, %v1670, 0
      %v1704 = vsel %vm1127, %v1671, 0
      %v1707 = vsel %vm1127, %v1672, 0
      %1709 = vmatprep.subr.mxu0 0.0
      %1710 = vmatpush1.msra.mxu0 %v1665
      %1711 = vmatprep.subr.mxu0 0.0
      %1712 = vmatpush1.msra.mxu0 %v1666
      %1713 = vmatprep.subr.mxu0 0.0
      %1714 = vmatpush1.msra.mxu0 %v1667
      %1715 = vmatprep.subr.mxu0 0.0
      %1716 = vmatpush1.msra.mxu0 %v1668
      %1717 = vmatprep.subr.mxu0 0.0
      %1718 = vmatpush1.msra.mxu0 0.0
      %1719 = vmatprep.subr.mxu0 0.0
      %1720 = vmatpush1.msra.mxu0 0.0
      %1721 = vmatprep.subr.mxu0 0.0
      %1722 = vmatpush1.msra.mxu0 0.0
      %1723 = vmatprep.subr.mxu0 0.0
      %1724 = vmatpush1.msra.mxu0 0.0
      %1725 = vmatprep.subr.mxu0 0.0
      %1726 = vmatpush1.msra.mxu0 0.0
      %1727 = vmatprep.subr.mxu0 0.0
      %1728 = vmatpush1.msra.mxu0 0.0
      %1729 = vmatprep.subr.mxu0 0.0
      %1730 = vmatpush1.msra.mxu0 0.0
      %1731 = vmatprep.subr.mxu0 0.0
      %1732 = vmatpush1.msra.mxu0 0.0
      %1733 = vmatprep.subr.mxu0 0.0
      %1734 = vmatpush1.msra.mxu0 0.0
      %1735 = vmatprep.subr.mxu0 0.0
      %1736 = vmatpush1.msra.mxu0 0.0
      %1737 = vmatprep.subr.mxu0 0.0
      %1738 = vmatpush1.msra.mxu0 0.0
      %1739 = vmatprep.subr.mxu0 0.0
      %1740 = vmatpush1.msra.mxu0 0.0
      %1741 = vmatprep.subr.mxu0 0.0
      %1742 = vmatpush1.msra.mxu0 0.0
      %1743 = vmatprep.subr.mxu0 0.0
      %1744 = vmatpush1.msra.mxu0 0.0
      %1745 = vmatprep.subr.mxu0 0.0
      %1746 = vmatpush1.msra.mxu0 0.0
      %1747 = vmatprep.subr.mxu0 0.0
      %1748 = vmatpush1.msra.mxu0 0.0
      %1749 = vmatprep.subr.mxu0 0.0
      %1750 = vmatpush1.msra.mxu0 0.0
      %1751 = vmatprep.subr.mxu0 0.0
      %1752 = vmatpush1.msra.mxu0 0.0
      %1753 = vmatprep.subr.mxu0 0.0
      %1754 = vmatpush1.msra.mxu0 0.0
      %1755 = vmatprep.subr.mxu0 0.0
      %1756 = vmatpush1.msra.mxu0 0.0
      %1757 = vmatprep.subr.mxu0 0.0
      %1758 = vmatpush1.msra.mxu0 0.0
      %1759 = vmatprep.subr.mxu0 0.0
      %1760 = vmatpush1.msra.mxu0 0.0
      %1761 = vmatprep.subr.mxu0 0.0
      %1762 = vmatpush1.msra.mxu0 0.0
      %1763 = vmatprep.subr.mxu0 0.0
      %1764 = vmatpush1.msra.mxu0 0.0
      %1765 = vmatprep.subr.mxu0 0.0
      %1766 = vmatpush1.msra.mxu0 0.0
      %1767 = vmatprep.subr.mxu0 0.0
      %1768 = vmatpush1.msra.mxu0 0.0
      %1769 = vmatprep.subr.mxu0 0.0
      %1770 = vmatpush1.msra.mxu0 0.0
      %1771 = vmatprep.subr.mxu0 0.0
      %1772 = vmatpush1.msra.mxu0 0.0
      %1773 = vmatprep.mubr.f32.mxu0 0.0
      %1774 = vmatmul.mubr.f32.gmra.mrb[0].mxu0 %v1698
      %v1775 = vpop.f32.mrb[0].mxu0
      %v1776 = vadd.f32 %v1680, %v1775
      %v1777 = vpop.f32.mrb[0].mxu0
      %1778 = vmatprep.mubr.f32.mxu0 0.0
      %1779 = vmatmul.mubr.f32.gmra.mrb[0].mxu0 %v1701
      %v1780 = vpop.f32.mrb[0].mxu0
      %v1781 = vadd.f32 %v1685, %v1780
      %v1782 = vpop.f32.mrb[0].mxu0
      %1783 = vmatprep.mubr.f32.mxu0 0.0
      %1784 = vmatmul.mubr.f32.gmra.mrb[0].mxu0 %v1704
      %v1785 = vpop.f32.mrb[0].mxu0
      %v1786 = vadd.f32 %v1690, %v1785
      %v1787 = vpop.f32.mrb[0].mxu0
      %1788 = vmatprep.mubr.f32.mxu0 0.0
      %1789 = vmatmul.mubr.f32.gmra.mrb[0].mxu0 %v1707
      %v1790 = vpop.f32.mrb[0].mxu0
      %v1791 = vadd.f32 %v1695, %v1790
      %v1792 = vpop.f32.mrb[0].mxu0
      %1793 = vdwg.mxu0
      %v1794 = vmul.f32 %v1776, 100.0
      %v1795 = vmul.f32 %v1781, 100.0
      %v1796 = vmul.f32 %v1786, 100.0
      %v1797 = vmul.f32 %v1791, 100.0
      %v1798 = vmin.f32 %v1794, 20.0
      %v1799 = vmin.f32 %v1795, 20.0
      %v1800 = vmin.f32 %v1796, 20.0
      %v1801 = vmin.f32 %v1797, 20.0
      %v1802 = vmul.f32 %v1798, 1.442695
      %v1803 = vpow.pop %v1802
      %v1804 = vmul.f32 %v1799, 1.442695
      %v1805 = vpow.pop %v1804
      %v1806 = vmul.f32 %v1800, 1.442695
      %v1807 = vpow.pop %v1806
      %v1808 = vmul.f32 %v1801, 1.442695
      %v1809 = vpow.pop %v1808
      %v1810 = vadd.f32 %v1803, 1.0
      %v1811 = vlog2.pop %v1810
      %v1812 = vmul.f32 %v1811, 0.6931472
      %v1813 = vmul.f32 -0.5, %v1803
      %v1814 = vadd.f32 %v1813, 1.0
      %v1815 = vmul.f32 %v1814, %v1803
      %v1816 = vand.u32 2147483647, %v1803
      %vm1817 = vcmp.lt.f32.partialorder %v1816, 0.0004427343
      %v1818 = vsel %vm1817, %v1815, %v1812
      %v1819 = vadd.f32 %v1805, 1.0
      %v1820 = vlog2.pop %v1819
      %v1821 = vmul.f32 %v1820, 0.6931472
      %v1822 = vmul.f32 -0.5, %v1805
      %v1823 = vadd.f32 %v1822, 1.0
      %v1824 = vmul.f32 %v1823, %v1805
      %v1825 = vand.u32 2147483647, %v1805
      %vm1826 = vcmp.lt.f32.partialorder %v1825, 0.0004427343
      %v1827 = vsel %vm1826, %v1824, %v1821
      %v1828 = vadd.f32 %v1807, 1.0
      %v1829 = vlog2.pop %v1828
      %v1830 = vmul.f32 %v1829, 0.6931472
      %v1831 = vmul.f32 -0.5, %v1807
      %v1832 = vadd.f32 %v1831, 1.0
      %v1833 = vmul.f32 %v1832, %v1807
      %v1834 = vand.u32 2147483647, %v1807
      %vm1835 = vcmp.lt.f32.partialorder %v1834, 0.0004427343
      %v1836 = vsel %vm1835, %v1833, %v1830
      %v1837 = vadd.f32 %v1809, 1.0
      %v1838 = vlog2.pop %v1837
      %v1839 = vmul.f32 %v1838, 0.6931472
      %v1840 = vmul.f32 -0.5, %v1809
      %v1841 = vadd.f32 %v1840, 1.0
      %v1842 = vmul.f32 %v1841, %v1809
      %v1843 = vand.u32 2147483647, %v1809
      %vm1844 = vcmp.lt.f32.partialorder %v1843, 0.0004427343
      %v1845 = vsel %vm1844, %v1842, %v1839
      %v1846 = vmul.f32 %v1818, %v1093
      %v1847 = vmul.f32 %v1827, %v1093
      %v1848 = vmul.f32 %v1836, %v1093
      %v1849 = vmul.f32 %v1845, %v1093
      %vm1850 = vcmp.gt.f32.partialorder %v1794, 20.0
      %vm1851 = vcmp.gt.f32.partialorder %v1795, 20.0
      %vm1852 = vcmp.gt.f32.partialorder %v1796, 20.0
      %vm1853 = vcmp.gt.f32.partialorder %v1797, 20.0
      %v1854 = vsel %vm1850, %v1776, %v1846
      %v1855 = vsel %vm1851, %v1781, %v1847
      %v1856 = vsel %vm1852, %v1786, %v1848
      %v1857 = vsel %vm1853, %v1791, %v1849
      %v1858 = vld [vmem:[%s788] sm:$0x1]
      %v1859 = vld [vmem:[%s791] sm:$0x1]
      %1861 = vset.pattern.permute.xlu0 0
      %1862 = vperm.xlu0 %1861, %v1859
      %v1863 = vpop.permute.xlu0 %1862
      %v1865 = vlaneseq
      %v1866 = vshrl.u32 %v1865, 7
      %v1867 = vsub.s32 0, %v1866
      %v1868 = vrot.slane %v1863, %v1867
      %v1870 = vsel %vm1127, %v1858, 0
      %1872 = vmatprep.subr.mxu0 0.0
      %1873 = vmatpush1.msra.mxu0 %v1854
      %1874 = vmatprep.subr.mxu0 0.0
      %1875 = vmatpush1.msra.mxu0 %v1855
      %1876 = vmatprep.subr.mxu0 0.0
      %1877 = vmatpush1.msra.mxu0 %v1856
      %1878 = vmatprep.subr.mxu0 0.0
      %1879 = vmatpush1.msra.mxu0 %v1857
      %1880 = vmatprep.subr.mxu0 0.0
      %1881 = vmatpush1.msra.mxu0 0.0
      %1882 = vmatprep.subr.mxu0 0.0
      %1883 = vmatpush1.msra.mxu0 0.0
      %1884 = vmatprep.subr.mxu0 0.0
      %1885 = vmatpush1.msra.mxu0 0.0
      %1886 = vmatprep.subr.mxu0 0.0
      %1887 = vmatpush1.msra.mxu0 0.0
      %1888 = vmatprep.subr.mxu0 0.0
      %1889 = vmatpush1.msra.mxu0 0.0
      %1890 = vmatprep.subr.mxu0 0.0
      %1891 = vmatpush1.msra.mxu0 0.0
      %1892 = vmatprep.subr.mxu0 0.0
      %1893 = vmatpush1.msra.mxu0 0.0
      %1894 = vmatprep.subr.mxu0 0.0
      %1895 = vmatpush1.msra.mxu0 0.0
      %1896 = vmatprep.subr.mxu0 0.0
      %1897 = vmatpush1.msra.mxu0 0.0
      %1898 = vmatprep.subr.mxu0 0.0
      %1899 = vmatpush1.msra.mxu0 0.0
      %1900 = vmatprep.subr.mxu0 0.0
      %1901 = vmatpush1.msra.mxu0 0.0
      %1902 = vmatprep.subr.mxu0 0.0
      %1903 = vmatpush1.msra.mxu0 0.0
      %1904 = vmatprep.subr.mxu0 0.0
      %1905 = vmatpush1.msra.mxu0 0.0
      %1906 = vmatprep.subr.mxu0 0.0
      %1907 = vmatpush1.msra.mxu0 0.0
      %1908 = vmatprep.subr.mxu0 0.0
      %1909 = vmatpush1.msra.mxu0 0.0
      %1910 = vmatprep.subr.mxu0 0.0
      %1911 = vmatpush1.msra.mxu0 0.0
      %1912 = vmatprep.subr.mxu0 0.0
      %1913 = vmatpush1.msra.mxu0 0.0
      %1914 = vmatprep.subr.mxu0 0.0
      %1915 = vmatpush1.msra.mxu0 0.0
      %1916 = vmatprep.subr.mxu0 0.0
      %1917 = vmatpush1.msra.mxu0 0.0
      %1918 = vmatprep.subr.mxu0 0.0
      %1919 = vmatpush1.msra.mxu0 0.0
      %1920 = vmatprep.subr.mxu0 0.0
      %1921 = vmatpush1.msra.mxu0 0.0
      %1922 = vmatprep.subr.mxu0 0.0
      %1923 = vmatpush1.msra.mxu0 0.0
      %1924 = vmatprep.subr.mxu0 0.0
      %1925 = vmatpush1.msra.mxu0 0.0
      %1926 = vmatprep.subr.mxu0 0.0
      %1927 = vmatpush1.msra.mxu0 0.0
      %1928 = vmatprep.subr.mxu0 0.0
      %1929 = vmatpush1.msra.mxu0 0.0
      %1930 = vmatprep.subr.mxu0 0.0
      %1931 = vmatpush1.msra.mxu0 0.0
      %1932 = vmatprep.subr.mxu0 0.0
      %1933 = vmatpush1.msra.mxu0 0.0
      %1934 = vmatprep.subr.mxu0 0.0
      %1935 = vmatpush1.msra.mxu0 0.0
      %1936 = vmatprep.mubr.f32.mxu0 0.0
      %1937 = vmatmul.mubr.f32.gmra.mrb[0].mxu0 %v1870
      %v1938 = vpop.f32.mrb[0].mxu0
      %v1939 = vadd.f32 %v1868, %v1938
      %v1940 = vpop.f32.mrb[0].mxu0
      %1941 = vdwg.mxu0
      %1942 = vst [vmem:[%s797] sm:$0x1] %v1939
      %p1943 = scmp.lt.s32.totalorder %s30, 5
      %s1944 = scalar_select %p1943, %s30, 5
      %p1945 = scmp.lt.s32.totalorder %s31, 0
      %s1946 = scalar_select %p1945, %s31, 0
      %s1947 = sadd.s32 %s1946, %s1944
      %s1948 = scalar_lea.vmem %s15, %s1947
      // Predicated region
      $region81: #{fast_ensemble_forward.1} parent=79 // pred_check
        %p1949 = pneg %p452
      $region82: #{fast_ensemble_forward.1} parent=79 // pred_check_branch
        %1951 = sbr.rel (%p1949) target = $region84
      $region83: #{fast_ensemble_forward.1} parent=79 // pred_region
        _
      $region84: #{fast_ensemble_forward.1} parent=79 // pred_fallthru
        _
    $region80: #{fast_ensemble_forward.1} parent=5 // pred_fallthru
      _
    %p1952 = scmp.le.s32.totalorder 2, %s21
    // Predicated region
    $region85: #{fast_ensemble_forward.1} parent=5 // pred_check
      %p1953 = pneg %p1952
    $region86: #{fast_ensemble_forward.1} parent=5 // pred_check_branch
      %1955 = sbr.rel (%p1953) target = $region88
    $region87: #{fast_ensemble_forward.1} parent=5 // pred_region
      %s1956 = ssub.s32 %s21, 2
      // Predicated region
      $region89: #{fast_ensemble_forward.1} parent=87 // pred_check
        %p1957 = pneg %p458
      $region90: #{fast_ensemble_forward.1} parent=87 // pred_check_branch
        %1959 = sbr.rel (%p1957) target = $region92
      $region91: #{fast_ensemble_forward.1} parent=87 // pred_region
        %p1960 = scmp.lt.s32.totalorder %s32, 5
        %s1961 = scalar_select %p1960, %s32, 5
        %p1962 = scmp.lt.s32.totalorder %s33, 0
        %s1963 = scalar_select %p1962, %s33, 0
        %s1964 = sadd.s32 %s1963, %s1961
        %s1965 = scalar_lea.vmem %s15, %s1964
      $region92: #{fast_ensemble_forward.1} parent=87 // pred_fallthru
        _
    $region88: #{fast_ensemble_forward.1} parent=5 // pred_fallthru
      _
  $region6: #{fast_ensemble_forward.1} parent=0 // loop_footer
    %s25 = sadd.s32 1, %s21
  $region7: #{fast_ensemble_forward.1} parent=0 // loop_footer_branch
    %20 = sbr.rel target = $region3
  $region8: #{fast_ensemble_forward.1} parent=0 // loop_exit
    _

</llo_original>
